<compile_context>
chip_gen: v7x
topology: tpu7x:2x2x1
jax: 0.10.0
libtpu: 0.0.40
codegen_flags: <defaults>
</compile_context>

<pallas_src>
import jax
import jax.numpy as jnp
from jax.experimental import pallas as pl
from jax.experimental.pallas import tpu as pltpu

STATE_DIM = 6
ACTION_DIM = 2
HIDDEN_DIM = 256
MAX_BATCH_TILE = 1024       # per-step batch tile upper bound (VMEM use ~few MiB)
_STEP_OVERHEAD_ROWS = 256   # ~0.35 us/step expressed as equivalent rows of work


def _round_up(x, m):
    return ((x + m - 1) // m) * m


def _choose_tile(b):
    """Pick the batch-tile size: single tile when possible, otherwise balance
    per-step pipeline overhead against padded-row waste."""
    b8 = _round_up(max(b, 1), 8)
    if b8 <= MAX_BATCH_TILE:
        return b8                       # single tile, <= 7 padded rows
    best_tm, best_cost = None, None
    for tm in (1024, 512, 256, 128):
        n_steps = -(-b8 // tm)
        cost = n_steps * (tm + _STEP_OVERHEAD_ROWS)   # rows of work + overhead
        if best_cost is None or cost < best_cost:
            best_tm, best_cost = tm, cost
    return best_tm


def _qnet_kernel(s_ref, a_ref, w1s_ref, w1a_ref, b1_ref, w2_ref, b2_ref,
                 w3_ref, b3_ref, w4_ref, b4_ref, o_ref):
    """One batch-tile grid step: both Q heads, 3x (Linear + ReLU) on the MXU,
    then the 256 -> 1 output layer as a VPU multiply + cross-lane reduction.
    Writes a packed (2, TM, 1) f32 block."""
    s = s_ref[...].astype(jnp.bfloat16)            # (TM, 6)
    a = a_ref[...].astype(jnp.bfloat16)            # (TM, 2)
    for hd in range(2):                            # unrolled; both heads resident
        h = (jnp.dot(s, w1s_ref[hd], preferred_element_type=jnp.float32)
             + jnp.dot(a, w1a_ref[hd], preferred_element_type=jnp.float32)
             + b1_ref[hd])
        h = jnp.maximum(h, 0.0).astype(jnp.bfloat16)
        h = jnp.dot(h, w2_ref[hd], preferred_element_type=jnp.float32) + b2_ref[hd]
        h = jnp.maximum(h, 0.0).astype(jnp.bfloat16)
        h = jnp.dot(h, w3_ref[hd], preferred_element_type=jnp.float32) + b3_ref[hd]
        h = jnp.maximum(h, 0.0)                    # (TM, H) f32
        # Final layer (H -> 1): elementwise multiply + cross-lane reduction.
        q = jnp.sum(h * w4_ref[hd], axis=-1, keepdims=True) + b4_ref[hd]   # (TM, 1)
        o_ref[hd] = q.astype(o_ref.dtype)


def _qnet_pallas(state, action, params, tm):
    b_pad, d_s = state.shape
    d_a = action.shape[1]
    n_bt = b_pad // tm
    h = HIDDEN_DIM
    w1s, w1a, b1, w2, b2, w3, b3, w4, b4 = params

    def resident(shape):
        # Constant block index -> weights stay VMEM-resident across batch tiles.
        return pl.BlockSpec(shape, lambda i: (0, 0, 0))

    in_specs = [
        pl.BlockSpec((tm, d_s), lambda i: (i, 0)),   # state (batch-tiled)
        pl.BlockSpec((tm, d_a), lambda i: (i, 0)),   # action (batch-tiled)
        resident((2, d_s, h)),                       # w1 state part (bf16)
        resident((2, d_a, h)),                       # w1 action part (bf16)
        resident((2, 1, h)),                         # b1 (f32)
        resident((2, h, h)),                         # w2 (bf16)
        resident((2, 1, h)),                         # b2
        resident((2, h, h)),                         # w3 (bf16)
        resident((2, 1, h)),                         # b3
        resident((2, 1, h)),                         # w4 row vector (f32)
        pl.BlockSpec(memory_space=pltpu.MemorySpace.SMEM),  # b4 scalars (2,)
    ]
    out_spec = pl.BlockSpec((2, tm, 1), lambda i: (0, i, 0))

    return pl.pallas_call(
        _qnet_kernel,
        out_shape=jax.ShapeDtypeStruct((2, b_pad, 1), jnp.float32),
        grid=(n_bt,),
        in_specs=in_specs,
        out_specs=out_spec,
        compiler_params=pltpu.CompilerParams(
            dimension_semantics=("parallel",)),
    )(state, action, w1s, w1a, b1, w2, b2, w3, b3, w4, b4)


@jax.jit
def qnetwork_forward(state, action, params):
    """Equivalent of QNetwork.forward(state, action) -> (q1, q2)."""
    state = state.astype(jnp.float32)
    action = action.astype(jnp.float32)
    b = state.shape[0]
    tm = _choose_tile(b)
    b_pad = _round_up(max(b, 1), tm)
    if b_pad != b:
        state = jnp.pad(state, ((0, b_pad - b), (0, 0)))
        action = jnp.pad(action, ((0, b_pad - b), (0, 0)))
    out = _qnet_pallas(state, action, params, tm)   # (2, b_pad, 1) packed
    q1 = out[0, :b]                                 # (b, 1)
    q2 = out[1, :b]
    return q1, q2


def _xavier_uniform(key, fan_in, fan_out, gain):
    bound = gain * (6.0 / (fan_in + fan_out)) ** 0.5
    return jax.random.uniform(key, (fan_in, fan_out), jnp.float32,
                              minval=-bound, maxval=bound)


def init_qnetwork_params(key, state_dim=STATE_DIM, action_dim=ACTION_DIM,
                         hidden_dim=HIDDEN_DIM):
    """Synthetic init matching the PyTorch module's layer shapes.

    Weights are stored as (in, out) so the kernel computes x @ W + b; each
    tensor is stacked along a leading head axis of size 2.  The first-layer
    weight is generated at full fan_in = state_dim + action_dim and then split
    into a state part and an action part.  Hidden weights are bf16; biases,
    the final-layer row and the output stay f32.  The final layer uses
    xavier_uniform(gain=0.001) + zero bias, matching _initialize_weights;
    hidden layers use xavier_uniform(gain=1) + zero bias as a stand-in for
    PyTorch's default Linear init (structural, not bitwise, parity).
    """
    d_in = state_dim + action_dim

    def make_head(hkey):
        ks = jax.random.split(hkey, 4)
        w1 = _xavier_uniform(ks[0], d_in, hidden_dim, 1.0)
        w1s = w1[:state_dim].astype(jnp.bfloat16)
        w1a = w1[state_dim:].astype(jnp.bfloat16)
        w2 = _xavier_uniform(ks[1], hidden_dim, hidden_dim, 1.0).astype(jnp.bfloat16)
        w3 = _xavier_uniform(ks[2], hidden_dim, hidden_dim, 1.0).astype(jnp.bfloat16)
        b1 = jnp.zeros((1, hidden_dim), jnp.float32)
        b2 = jnp.zeros((1, hidden_dim), jnp.float32)
        b3 = jnp.zeros((1, hidden_dim), jnp.float32)
        # final layer (hidden_dim -> 1), stored as a row vector for the VPU reduce
        w4 = _xavier_uniform(ks[3], hidden_dim, 1, 0.001).reshape(1, hidden_dim)
        b4 = jnp.zeros((), jnp.float32)
        return (w1s, w1a, b1, w2, b2, w3, b3, w4, b4)

    k1, k2 = jax.random.split(key)
    h1 = make_head(k1)
    h2 = make_head(k2)
    return tuple(jnp.stack([a, b], axis=0) for a, b in zip(h1, h2))


def _reference_forward(state, action, params, head):
    """Plain-JAX reference for one head, mirroring the kernel's bf16/f32 math."""
    w1s, w1a, b1, w2, b2, w3, b3, w4, b4 = (p[head] for p in params)
    s = state.astype(jnp.bfloat16)
    a = action.astype(jnp.bfloat16)
    h = (jnp.dot(s, w1s, preferred_element_type=jnp.float32)
         + jnp.dot(a, w1a, preferred_element_type=jnp.float32) + b1)
    h = jnp.maximum(h, 0.0).astype(jnp.bfloat16)
    h = jnp.dot(h, w2, preferred_element_type=jnp.float32) + b2
    h = jnp.maximum(h, 0.0).astype(jnp.bfloat16)
    h = jnp.dot(h, w3, preferred_element_type=jnp.float32) + b3
    h = jnp.maximum(h, 0.0)
    return jnp.sum(h * w4, axis=-1, keepdims=True) + b4


if __name__ == "__main__":
    key = jax.random.PRNGKey(0)
    k_params, k_state, k_action = jax.random.split(key, 3)

    params = init_qnetwork_params(k_params)

    batch = 2
    state = jax.random.normal(k_state, (batch, STATE_DIM), jnp.float32)
    action = jax.random.normal(k_action, (batch, ACTION_DIM), jnp.float32)

    q1, q2 = qnetwork_forward(state, action, params)
    jax.block_until_ready((q1, q2))

    # sanity check against plain-JAX reference (same bf16 weights / f32 accum)
    q1_ref = _reference_forward(state, action, params, 0)
    q2_ref = _reference_forward(state, action, params, 1)
    assert q1.shape == (batch, 1) and q2.shape == (batch, 1)
    assert jnp.allclose(q1, q1_ref, atol=1e-4, rtol=1e-3), "q1 mismatch"
    assert jnp.allclose(q2, q2_ref, atol=1e-4, rtol=1e-3), "q2 mismatch"

    print("KERNEL_OK")
</pallas_src>

<mosaic_0001>
module attributes {stable_mosaic.version = 11 : i64} {
  func.func @_qnet_kernel(%arg0: i32, %arg1: memref<8x6xf32, #tpu.memory_space<vmem>>, %arg2: memref<8x2xf32, #tpu.memory_space<vmem>>, %arg3: memref<2x6x256xbf16, #tpu.memory_space<vmem>>, %arg4: memref<2x2x256xbf16, #tpu.memory_space<vmem>>, %arg5: memref<2x1x256xf32, #tpu.memory_space<vmem>>, %arg6: memref<2x256x256xbf16, #tpu.memory_space<vmem>>, %arg7: memref<2x1x256xf32, #tpu.memory_space<vmem>>, %arg8: memref<2x256x256xbf16, #tpu.memory_space<vmem>>, %arg9: memref<2x1x256xf32, #tpu.memory_space<vmem>>, %arg10: memref<2x1x256xf32, #tpu.memory_space<vmem>>, %arg11: memref<2xf32, #tpu.memory_space<smem>>, %arg12: memref<2x8x1xf32, #tpu.memory_space<vmem>>) attributes {dimension_semantics = [#tpu.dimension_semantics<parallel>], iteration_bounds = array<i64: 1>, scalar_prefetch = 0 : i64, scratch_operands = 0 : i64, tpu.core_type = #tpu.core_type<tc>, window_params = [{transform_indices = @transform_0, window_bounds = array<i64: 8, 6>}, {transform_indices = @transform_1, window_bounds = array<i64: 8, 2>}, {pipeline_mode = #tpu.pipeline_mode<synchronous>, transform_indices = @transform_2, window_bounds = array<i64: 2, 6, 256>}, {pipeline_mode = #tpu.pipeline_mode<synchronous>, transform_indices = @transform_3, window_bounds = array<i64: 2, 2, 256>}, {pipeline_mode = #tpu.pipeline_mode<synchronous>, transform_indices = @transform_4, window_bounds = array<i64: 2, 1, 256>}, {pipeline_mode = #tpu.pipeline_mode<synchronous>, transform_indices = @transform_5, window_bounds = array<i64: 2, 256, 256>}, {pipeline_mode = #tpu.pipeline_mode<synchronous>, transform_indices = @transform_6, window_bounds = array<i64: 2, 1, 256>}, {pipeline_mode = #tpu.pipeline_mode<synchronous>, transform_indices = @transform_7, window_bounds = array<i64: 2, 256, 256>}, {pipeline_mode = #tpu.pipeline_mode<synchronous>, transform_indices = @transform_8, window_bounds = array<i64: 2, 1, 256>}, {pipeline_mode = #tpu.pipeline_mode<synchronous>, transform_indices = @transform_9, window_bounds = array<i64: 2, 1, 256>}, {transform_indices = @transform_10, window_bounds = array<i64: 2>}, {transform_indices = @transform_11, window_bounds = array<i64: 2, 8, 1>}]} {
    %c0 = arith.constant 0 : index
    %c0_0 = arith.constant 0 : index
    %0 = vector.load %arg1[%c0, %c0_0] : memref<8x6xf32, #tpu.memory_space<vmem>>, vector<8x6xf32>
    %1 = arith.truncf %0 : vector<8x6xf32> to vector<8x6xbf16>
    %c0_1 = arith.constant 0 : index
    %c0_2 = arith.constant 0 : index
    %2 = vector.load %arg2[%c0_1, %c0_2] : memref<8x2xf32, #tpu.memory_space<vmem>>, vector<8x2xf32>
    %3 = arith.truncf %2 : vector<8x2xf32> to vector<8x2xbf16>
    %c0_3 = arith.constant 0 : index
    %c0_4 = arith.constant 0 : index
    %c0_5 = arith.constant 0 : index
    %4 = vector.load %arg3[%c0_3, %c0_4, %c0_5] : memref<2x6x256xbf16, #tpu.memory_space<vmem>>, vector<1x6x256xbf16>
    %5 = vector.shape_cast %4 : vector<1x6x256xbf16> to vector<6x256xbf16>
    %cst = arith.constant dense<0.000000e+00> : vector<8x256xf32>
    %6 = tpu.matmul %1, %5, %cst {dimension_numbers = #tpu.dot_dimension_numbers<[1], [0], [0], [1], [0, 0, 1, 1], [], []>} : vector<8x6xbf16>, vector<6x256xbf16>, vector<8x256xf32> -> vector<8x256xf32>
    %c0_6 = arith.constant 0 : index
    %c0_7 = arith.constant 0 : index
    %c0_8 = arith.constant 0 : index
    %7 = vector.load %arg4[%c0_6, %c0_7, %c0_8] : memref<2x2x256xbf16, #tpu.memory_space<vmem>>, vector<1x2x256xbf16>
    %8 = vector.shape_cast %7 : vector<1x2x256xbf16> to vector<2x256xbf16>
    %cst_9 = arith.constant dense<0.000000e+00> : vector<8x256xf32>
    %9 = tpu.matmul %3, %8, %cst_9 {dimension_numbers = #tpu.dot_dimension_numbers<[1], [0], [0], [1], [0, 0, 1, 1], [], []>} : vector<8x2xbf16>, vector<2x256xbf16>, vector<8x256xf32> -> vector<8x256xf32>
    %10 = arith.addf %6, %9 : vector<8x256xf32>
    %c0_10 = arith.constant 0 : index
    %c0_11 = arith.constant 0 : index
    %c0_12 = arith.constant 0 : index
    %11 = vector.load %arg5[%c0_10, %c0_11, %c0_12] : memref<2x1x256xf32, #tpu.memory_space<vmem>>, vector<1x1x256xf32>
    %12 = vector.shape_cast %11 : vector<1x1x256xf32> to vector<1x256xf32>
    %13 = vector.broadcast %12 : vector<1x256xf32> to vector<8x256xf32>
    %14 = arith.addf %10, %13 : vector<8x256xf32>
    %cst_13 = arith.constant 0.000000e+00 : f32
    %15 = vector.broadcast %cst_13 : f32 to vector<8x256xf32>
    %16 = arith.maximumf %14, %15 : vector<8x256xf32>
    %17 = arith.truncf %16 : vector<8x256xf32> to vector<8x256xbf16>
    %c0_14 = arith.constant 0 : index
    %c0_15 = arith.constant 0 : index
    %c0_16 = arith.constant 0 : index
    %18 = vector.load %arg6[%c0_14, %c0_15, %c0_16] : memref<2x256x256xbf16, #tpu.memory_space<vmem>>, vector<1x256x256xbf16>
    %19 = vector.shape_cast %18 : vector<1x256x256xbf16> to vector<256x256xbf16>
    %cst_17 = arith.constant dense<0.000000e+00> : vector<8x256xf32>
    %20 = tpu.matmul %17, %19, %cst_17 {dimension_numbers = #tpu.dot_dimension_numbers<[1], [0], [0], [1], [0, 0, 1, 1], [], []>} : vector<8x256xbf16>, vector<256x256xbf16>, vector<8x256xf32> -> vector<8x256xf32>
    %c0_18 = arith.constant 0 : index
    %c0_19 = arith.constant 0 : index
    %c0_20 = arith.constant 0 : index
    %21 = vector.load %arg7[%c0_18, %c0_19, %c0_20] : memref<2x1x256xf32, #tpu.memory_space<vmem>>, vector<1x1x256xf32>
    %22 = vector.shape_cast %21 : vector<1x1x256xf32> to vector<1x256xf32>
    %23 = vector.broadcast %22 : vector<1x256xf32> to vector<8x256xf32>
    %24 = arith.addf %20, %23 : vector<8x256xf32>
    %cst_21 = arith.constant 0.000000e+00 : f32
    %25 = vector.broadcast %cst_21 : f32 to vector<8x256xf32>
    %26 = arith.maximumf %24, %25 : vector<8x256xf32>
    %27 = arith.truncf %26 : vector<8x256xf32> to vector<8x256xbf16>
    %c0_22 = arith.constant 0 : index
    %c0_23 = arith.constant 0 : index
    %c0_24 = arith.constant 0 : index
    %28 = vector.load %arg8[%c0_22, %c0_23, %c0_24] : memref<2x256x256xbf16, #tpu.memory_space<vmem>>, vector<1x256x256xbf16>
    %29 = vector.shape_cast %28 : vector<1x256x256xbf16> to vector<256x256xbf16>
    %cst_25 = arith.constant dense<0.000000e+00> : vector<8x256xf32>
    %30 = tpu.matmul %27, %29, %cst_25 {dimension_numbers = #tpu.dot_dimension_numbers<[1], [0], [0], [1], [0, 0, 1, 1], [], []>} : vector<8x256xbf16>, vector<256x256xbf16>, vector<8x256xf32> -> vector<8x256xf32>
    %c0_26 = arith.constant 0 : index
    %c0_27 = arith.constant 0 : index
    %c0_28 = arith.constant 0 : index
    %31 = vector.load %arg9[%c0_26, %c0_27, %c0_28] : memref<2x1x256xf32, #tpu.memory_space<vmem>>, vector<1x1x256xf32>
    %32 = vector.shape_cast %31 : vector<1x1x256xf32> to vector<1x256xf32>
    %33 = vector.broadcast %32 : vector<1x256xf32> to vector<8x256xf32>
    %34 = arith.addf %30, %33 : vector<8x256xf32>
    %cst_29 = arith.constant 0.000000e+00 : f32
    %35 = vector.broadcast %cst_29 : f32 to vector<8x256xf32>
    %36 = arith.maximumf %34, %35 : vector<8x256xf32>
    %c0_30 = arith.constant 0 : index
    %c0_31 = arith.constant 0 : index
    %c0_32 = arith.constant 0 : index
    %37 = vector.load %arg10[%c0_30, %c0_31, %c0_32] : memref<2x1x256xf32, #tpu.memory_space<vmem>>, vector<1x1x256xf32>
    %38 = vector.shape_cast %37 : vector<1x1x256xf32> to vector<1x256xf32>
    %39 = vector.broadcast %38 : vector<1x256xf32> to vector<8x256xf32>
    %40 = arith.mulf %36, %39 : vector<8x256xf32>
    %cst_33 = arith.constant dense<0.000000e+00> : vector<8xf32>
    %41 = vector.multi_reduction <add>, %40, %cst_33 [1] : vector<8x256xf32> to vector<8xf32>
    %42 = vector.shape_cast %41 : vector<8xf32> to vector<8x1xf32>
    %c0_34 = arith.constant 0 : index
    %43 = memref.load %arg11[%c0_34] : memref<2xf32, #tpu.memory_space<smem>>
    %44 = vector.broadcast %43 : f32 to vector<8x1xf32>
    %45 = arith.addf %42, %44 : vector<8x1xf32>
    %c0_35 = arith.constant 0 : index
    %c0_36 = arith.constant 0 : index
    %c0_37 = arith.constant 0 : index
    %46 = vector.load %arg12[%c0_35, %c0_36, %c0_37] : memref<2x8x1xf32, #tpu.memory_space<vmem>>, vector<1x8x1xf32>
    %47 = vector.shape_cast %46 : vector<1x8x1xf32> to vector<8x1xf32>
    %48 = vector.shape_cast %45 : vector<8x1xf32> to vector<1x8x1xf32>
    tpu.vector_store %arg12[%c0_35, %c0_36, %c0_37], %48 {strides = array<i32>} : memref<2x8x1xf32, #tpu.memory_space<vmem>>, vector<1x8x1xf32>,
    %c1 = arith.constant 1 : index
    %c0_38 = arith.constant 0 : index
    %c0_39 = arith.constant 0 : index
    %49 = vector.load %arg3[%c1, %c0_38, %c0_39] : memref<2x6x256xbf16, #tpu.memory_space<vmem>>, vector<1x6x256xbf16>
    %50 = vector.shape_cast %49 : vector<1x6x256xbf16> to vector<6x256xbf16>
    %cst_40 = arith.constant dense<0.000000e+00> : vector<8x256xf32>
    %51 = tpu.matmul %1, %50, %cst_40 {dimension_numbers = #tpu.dot_dimension_numbers<[1], [0], [0], [1], [0, 0, 1, 1], [], []>} : vector<8x6xbf16>, vector<6x256xbf16>, vector<8x256xf32> -> vector<8x256xf32>
    %c1_41 = arith.constant 1 : index
    %c0_42 = arith.constant 0 : index
    %c0_43 = arith.constant 0 : index
    %52 = vector.load %arg4[%c1_41, %c0_42, %c0_43] : memref<2x2x256xbf16, #tpu.memory_space<vmem>>, vector<1x2x256xbf16>
    %53 = vector.shape_cast %52 : vector<1x2x256xbf16> to vector<2x256xbf16>
    %cst_44 = arith.constant dense<0.000000e+00> : vector<8x256xf32>
    %54 = tpu.matmul %3, %53, %cst_44 {dimension_numbers = #tpu.dot_dimension_numbers<[1], [0], [0], [1], [0, 0, 1, 1], [], []>} : vector<8x2xbf16>, vector<2x256xbf16>, vector<8x256xf32> -> vector<8x256xf32>
    %55 = arith.addf %51, %54 : vector<8x256xf32>
    %c1_45 = arith.constant 1 : index
    %c0_46 = arith.constant 0 : index
    %c0_47 = arith.constant 0 : index
    %56 = vector.load %arg5[%c1_45, %c0_46, %c0_47] : memref<2x1x256xf32, #tpu.memory_space<vmem>>, vector<1x1x256xf32>
    %57 = vector.shape_cast %56 : vector<1x1x256xf32> to vector<1x256xf32>
    %58 = vector.broadcast %57 : vector<1x256xf32> to vector<8x256xf32>
    %59 = arith.addf %55, %58 : vector<8x256xf32>
    %cst_48 = arith.constant 0.000000e+00 : f32
    %60 = vector.broadcast %cst_48 : f32 to vector<8x256xf32>
    %61 = arith.maximumf %59, %60 : vector<8x256xf32>
    %62 = arith.truncf %61 : vector<8x256xf32> to vector<8x256xbf16>
    %c1_49 = arith.constant 1 : index
    %c0_50 = arith.constant 0 : index
    %c0_51 = arith.constant 0 : index
    %63 = vector.load %arg6[%c1_49, %c0_50, %c0_51] : memref<2x256x256xbf16, #tpu.memory_space<vmem>>, vector<1x256x256xbf16>
    %64 = vector.shape_cast %63 : vector<1x256x256xbf16> to vector<256x256xbf16>
    %cst_52 = arith.constant dense<0.000000e+00> : vector<8x256xf32>
    %65 = tpu.matmul %62, %64, %cst_52 {dimension_numbers = #tpu.dot_dimension_numbers<[1], [0], [0], [1], [0, 0, 1, 1], [], []>} : vector<8x256xbf16>, vector<256x256xbf16>, vector<8x256xf32> -> vector<8x256xf32>
    %c1_53 = arith.constant 1 : index
    %c0_54 = arith.constant 0 : index
    %c0_55 = arith.constant 0 : index
    %66 = vector.load %arg7[%c1_53, %c0_54, %c0_55] : memref<2x1x256xf32, #tpu.memory_space<vmem>>, vector<1x1x256xf32>
    %67 = vector.shape_cast %66 : vector<1x1x256xf32> to vector<1x256xf32>
    %68 = vector.broadcast %67 : vector<1x256xf32> to vector<8x256xf32>
    %69 = arith.addf %65, %68 : vector<8x256xf32>
    %cst_56 = arith.constant 0.000000e+00 : f32
    %70 = vector.broadcast %cst_56 : f32 to vector<8x256xf32>
    %71 = arith.maximumf %69, %70 : vector<8x256xf32>
    %72 = arith.truncf %71 : vector<8x256xf32> to vector<8x256xbf16>
    %c1_57 = arith.constant 1 : index
    %c0_58 = arith.constant 0 : index
    %c0_59 = arith.constant 0 : index
    %73 = vector.load %arg8[%c1_57, %c0_58, %c0_59] : memref<2x256x256xbf16, #tpu.memory_space<vmem>>, vector<1x256x256xbf16>
    %74 = vector.shape_cast %73 : vector<1x256x256xbf16> to vector<256x256xbf16>
    %cst_60 = arith.constant dense<0.000000e+00> : vector<8x256xf32>
    %75 = tpu.matmul %72, %74, %cst_60 {dimension_numbers = #tpu.dot_dimension_numbers<[1], [0], [0], [1], [0, 0, 1, 1], [], []>} : vector<8x256xbf16>, vector<256x256xbf16>, vector<8x256xf32> -> vector<8x256xf32>
    %c1_61 = arith.constant 1 : index
    %c0_62 = arith.constant 0 : index
    %c0_63 = arith.constant 0 : index
    %76 = vector.load %arg9[%c1_61, %c0_62, %c0_63] : memref<2x1x256xf32, #tpu.memory_space<vmem>>, vector<1x1x256xf32>
    %77 = vector.shape_cast %76 : vector<1x1x256xf32> to vector<1x256xf32>
    %78 = vector.broadcast %77 : vector<1x256xf32> to vector<8x256xf32>
    %79 = arith.addf %75, %78 : vector<8x256xf32>
    %cst_64 = arith.constant 0.000000e+00 : f32
    %80 = vector.broadcast %cst_64 : f32 to vector<8x256xf32>
    %81 = arith.maximumf %79, %80 : vector<8x256xf32>
    %c1_65 = arith.constant 1 : index
    %c0_66 = arith.constant 0 : index
    %c0_67 = arith.constant 0 : index
    %82 = vector.load %arg10[%c1_65, %c0_66, %c0_67] : memref<2x1x256xf32, #tpu.memory_space<vmem>>, vector<1x1x256xf32>
    %83 = vector.shape_cast %82 : vector<1x1x256xf32> to vector<1x256xf32>
    %84 = vector.broadcast %83 : vector<1x256xf32> to vector<8x256xf32>
    %85 = arith.mulf %81, %84 : vector<8x256xf32>
    %cst_68 = arith.constant dense<0.000000e+00> : vector<8xf32>
    %86 = vector.multi_reduction <add>, %85, %cst_68 [1] : vector<8x256xf32> to vector<8xf32>
    %87 = vector.shape_cast %86 : vector<8xf32> to vector<8x1xf32>
    %c1_69 = arith.constant 1 : index
    %88 = memref.load %arg11[%c1_69] : memref<2xf32, #tpu.memory_space<smem>>
    %89 = vector.broadcast %88 : f32 to vector<8x1xf32>
    %90 = arith.addf %87, %89 : vector<8x1xf32>
    %c1_70 = arith.constant 1 : index
    %c0_71 = arith.constant 0 : index
    %c0_72 = arith.constant 0 : index
    %91 = vector.load %arg12[%c1_70, %c0_71, %c0_72] : memref<2x8x1xf32, #tpu.memory_space<vmem>>, vector<1x8x1xf32>
    %92 = vector.shape_cast %91 : vector<1x8x1xf32> to vector<8x1xf32>
    %93 = vector.shape_cast %90 : vector<8x1xf32> to vector<1x8x1xf32>
    tpu.vector_store %arg12[%c1_70, %c0_71, %c0_72], %93 {strides = array<i32>} : memref<2x8x1xf32, #tpu.memory_space<vmem>>, vector<1x8x1xf32>,
    return
  }
  func.func @transform_0(%arg0: i32) -> (i32, i32) {
    %c0_i32 = arith.constant 0 : i32
    %c0_i32_0 = arith.constant 0 : i32
    return %arg0, %c0_i32 : i32, i32
  }
  func.func @transform_1(%arg0: i32) -> (i32, i32) {
    %c0_i32 = arith.constant 0 : i32
    %c0_i32_0 = arith.constant 0 : i32
    return %arg0, %c0_i32 : i32, i32
  }
  func.func @transform_2(%arg0: i32) -> (i32, i32, i32) {
    %c0_i32 = arith.constant 0 : i32
    %c0_i32_0 = arith.constant 0 : i32
    %c0_i32_1 = arith.constant 0 : i32
    %c0_i32_2 = arith.constant 0 : i32
    return %c0_i32, %c0_i32_0, %c0_i32_1 : i32, i32, i32
  }
  func.func @transform_3(%arg0: i32) -> (i32, i32, i32) {
    %c0_i32 = arith.constant 0 : i32
    %c0_i32_0 = arith.constant 0 : i32
    %c0_i32_1 = arith.constant 0 : i32
    %c0_i32_2 = arith.constant 0 : i32
    return %c0_i32, %c0_i32_0, %c0_i32_1 : i32, i32, i32
  }
  func.func @transform_4(%arg0: i32) -> (i32, i32, i32) {
    %c0_i32 = arith.constant 0 : i32
    %c0_i32_0 = arith.constant 0 : i32
    %c0_i32_1 = arith.constant 0 : i32
    %c0_i32_2 = arith.constant 0 : i32
    return %c0_i32, %c0_i32_0, %c0_i32_1 : i32, i32, i32
  }
  func.func @transform_5(%arg0: i32) -> (i32, i32, i32) {
    %c0_i32 = arith.constant 0 : i32
    %c0_i32_0 = arith.constant 0 : i32
    %c0_i32_1 = arith.constant 0 : i32
    %c0_i32_2 = arith.constant 0 : i32
    return %c0_i32, %c0_i32_0, %c0_i32_1 : i32, i32, i32
  }
  func.func @transform_6(%arg0: i32) -> (i32, i32, i32) {
    %c0_i32 = arith.constant 0 : i32
    %c0_i32_0 = arith.constant 0 : i32
    %c0_i32_1 = arith.constant 0 : i32
    %c0_i32_2 = arith.constant 0 : i32
    return %c0_i32, %c0_i32_0, %c0_i32_1 : i32, i32, i32
  }
  func.func @transform_7(%arg0: i32) -> (i32, i32, i32) {
    %c0_i32 = arith.constant 0 : i32
    %c0_i32_0 = arith.constant 0 : i32
    %c0_i32_1 = arith.constant 0 : i32
    %c0_i32_2 = arith.constant 0 : i32
    return %c0_i32, %c0_i32_0, %c0_i32_1 : i32, i32, i32
  }
  func.func @transform_8(%arg0: i32) -> (i32, i32, i32) {
    %c0_i32 = arith.constant 0 : i32
    %c0_i32_0 = arith.constant 0 : i32
    %c0_i32_1 = arith.constant 0 : i32
    %c0_i32_2 = arith.constant 0 : i32
    return %c0_i32, %c0_i32_0, %c0_i32_1 : i32, i32, i32
  }
  func.func @transform_9(%arg0: i32) -> (i32, i32, i32) {
    %c0_i32 = arith.constant 0 : i32
    %c0_i32_0 = arith.constant 0 : i32
    %c0_i32_1 = arith.constant 0 : i32
    %c0_i32_2 = arith.constant 0 : i32
    return %c0_i32, %c0_i32_0, %c0_i32_1 : i32, i32, i32
  }
  func.func @transform_10(%arg0: i32) -> i32 {
    %c0_i32 = arith.constant 0 : i32
    %c0_i32_0 = arith.constant 0 : i32
    return %c0_i32 : i32
  }
  func.func @transform_11(%arg0: i32) -> (i32, i32, i32) {
    %c0_i32 = arith.constant 0 : i32
    %c0_i32_0 = arith.constant 0 : i32
    %c0_i32_1 = arith.constant 0 : i32
    return %c0_i32, %arg0, %c0_i32_0 : i32, i32, i32
  }
}

</mosaic_0001>

<llo_original>
// kernel: qnetwork_forward.1
$region0: #{qnetwork_forward.1}
  #allocation0 [shape = 'u32[]', space=smem, size = 0x4, offset = 0x4, fixed_abs, tag = 'smem constant byte address 0x4 - core index']
  #allocation1 [shape = 'u32[144,128]{1,0:T(1,128)}', space=vmem, size = 0x12000, scoped, tag = 'internal scratch']
  %s0 = inlined_call_operand.vmem [shape: f32[8,6], index: 0, kind: input, shape index: {}]
  %s1 = inlined_call_operand.vmem [shape: f32[8,2], index: 1, kind: input, shape index: {}]
  %s2 = inlined_call_operand.vmem [shape: bf16[2,6,256], index: 2, kind: input, shape index: {}]
  %s3 = inlined_call_operand.vmem [shape: bf16[2,2,256], index: 3, kind: input, shape index: {}]
  %s4 = inlined_call_operand.vmem [shape: f32[2,1,256], index: 4, kind: input, shape index: {}]
  %s5 = inlined_call_operand.hbm [shape: bf16[2,256,256], index: 5, kind: input, shape index: {}]
  %s6 = inlined_call_operand.vmem [shape: f32[2,1,256], index: 6, kind: input, shape index: {}]
  %s7 = inlined_call_operand.hbm [shape: bf16[2,256,256], index: 7, kind: input, shape index: {}]
  %s8 = inlined_call_operand.vmem [shape: f32[2,1,256], index: 8, kind: input, shape index: {}]
  %s9 = inlined_call_operand.vmem [shape: f32[2,1,256], index: 9, kind: input, shape index: {}]
  %s10 = inlined_call_operand.vmem [shape: f32[2], index: 10, kind: input, shape index: {}]
  %s11 = inlined_call_operand.vmem [shape: f32[2,8,1], index: 11, kind: output, shape index: {}]
  %s12 = sld [smem:[#allocation0]]
  $region66: #{qnetwork_forward.1} parent=0
    _
  %s14 = ssub.s32 1, %s12
  %s15 = scalar_select 0, %s14, %s12
  $region1: #{qnetwork_forward.1} parent=0
    #allocation2 [shape = 'u8[262144]{0}', space=vmem, size = 0x40000, scoped, tag = 'input window, operand 5, single buffered']
    #allocation3 [shape = 's32[1]{0}', space=sflag, size = 0x4, scoped, tag = 'scoped memory for qnetwork_forward.1']
    #allocation4 [shape = 's32[1]{0}', space=sflag, size = 0x4, scoped, tag = 'scoped memory for qnetwork_forward.1']
    #allocation5 [shape = 'u8[262144]{0}', space=vmem, size = 0x40000, scoped, tag = 'input window, operand 7, single buffered']
    #allocation6 [shape = 's32[1]{0}', space=sflag, size = 0x4, scoped, tag = 'scoped memory for qnetwork_forward.1']
    #allocation7 [shape = 'u8[512]{0}', space=smem, size = 0x200, scoped, tag = 'input window, operand 10, single buffered']
    %16 = vsyncpa [#allocation3], 0
    %17 = vsyncpa [#allocation6], 0
    %18 = vsyncpa [#allocation4], 0
    // Predicated region
    $region2: #{qnetwork_forward.1} parent=1 // pred_check
      _
    $region3: #{qnetwork_forward.1} parent=1 // pred_check_branch
      %20 = sbr.rel (0) target = $region5
    $region4: #{qnetwork_forward.1} parent=1 // pred_region
      _
    $region5: #{qnetwork_forward.1} parent=1 // pred_fallthru
      _
    // Predicated region
    $region6: #{qnetwork_forward.1} parent=1 // pred_check
      _
    $region7: #{qnetwork_forward.1} parent=1 // pred_check_branch
      %22 = sbr.rel (0) target = $region9
    $region8: #{qnetwork_forward.1} parent=1 // pred_region
      _
    $region9: #{qnetwork_forward.1} parent=1 // pred_fallthru
      _
    // Predicated region
    $region10: #{qnetwork_forward.1} parent=1 // pred_check
      _
    $region11: #{qnetwork_forward.1} parent=1 // pred_check_branch
      %24 = sbr.rel (0) target = $region13
    $region12: #{qnetwork_forward.1} parent=1 // pred_region
      _
    $region13: #{qnetwork_forward.1} parent=1 // pred_fallthru
      _
    // Predicated region
    $region14: #{qnetwork_forward.1} parent=1 // pred_check
      _
    $region15: #{qnetwork_forward.1} parent=1 // pred_check_branch
      %26 = sbr.rel (0) target = $region17
    $region16: #{qnetwork_forward.1} parent=1 // pred_region
      _
    $region17: #{qnetwork_forward.1} parent=1 // pred_fallthru
      _
    // Predicated region
    $region18: #{qnetwork_forward.1} parent=1 // pred_check
      _
    $region19: #{qnetwork_forward.1} parent=1 // pred_check_branch
      %28 = sbr.rel (0) target = $region21
    $region20: #{qnetwork_forward.1} parent=1 // pred_region
      _
    $region21: #{qnetwork_forward.1} parent=1 // pred_fallthru
      _
    // Predicated region
    $region22: #{qnetwork_forward.1} parent=1 // pred_check
      _
    $region23: #{qnetwork_forward.1} parent=1 // pred_check_branch
      %30 = sbr.rel (0) target = $region25
    $region24: #{qnetwork_forward.1} parent=1 // pred_region
      %s32 = ssub.s32 8192, 8192
      %33 = vsyncadd [#allocation3], %s32
      %s34 = sshll.u32 [#allocation2], 4
      %s35 = int_to_ptr.vmem [resolvable:$true] %s34
      %40 = dma.hbm_to_vmem [thread:$0]  %s5, 8192, %s35, [#allocation3], 128, 128, 8
    $region25: #{qnetwork_forward.1} parent=1 // pred_fallthru
      _
    // Predicated region
    $region26: #{qnetwork_forward.1} parent=1 // pred_check
      _
    $region27: #{qnetwork_forward.1} parent=1 // pred_check_branch
      %42 = sbr.rel (0) target = $region29
    $region28: #{qnetwork_forward.1} parent=1 // pred_region
      _
    $region29: #{qnetwork_forward.1} parent=1 // pred_fallthru
      _
    // Predicated region
    $region30: #{qnetwork_forward.1} parent=1 // pred_check
      _
    $region31: #{qnetwork_forward.1} parent=1 // pred_check_branch
      %44 = sbr.rel (0) target = $region33
    $region32: #{qnetwork_forward.1} parent=1 // pred_region
      %s46 = ssub.s32 8192, 8192
      %47 = vsyncadd [#allocation6], %s46
      %s48 = sshll.u32 [#allocation5], 4
      %s49 = int_to_ptr.vmem [resolvable:$true] %s48
      %54 = dma.hbm_to_vmem [thread:$0]  %s7, 8192, %s49, [#allocation6], 128, 128, 8
    $region33: #{qnetwork_forward.1} parent=1 // pred_fallthru
      _
    // Predicated region
    $region34: #{qnetwork_forward.1} parent=1 // pred_check
      _
    $region35: #{qnetwork_forward.1} parent=1 // pred_check_branch
      %56 = sbr.rel (0) target = $region37
    $region36: #{qnetwork_forward.1} parent=1 // pred_region
      _
    $region37: #{qnetwork_forward.1} parent=1 // pred_fallthru
      _
    // Predicated region
    $region38: #{qnetwork_forward.1} parent=1 // pred_check
      _
    $region39: #{qnetwork_forward.1} parent=1 // pred_check_branch
      %58 = sbr.rel (0) target = $region41
    $region40: #{qnetwork_forward.1} parent=1 // pred_region
      _
    $region41: #{qnetwork_forward.1} parent=1 // pred_fallthru
      _
    // Predicated region
    $region42: #{qnetwork_forward.1} parent=1 // pred_check
      _
    $region43: #{qnetwork_forward.1} parent=1 // pred_check_branch
      %60 = sbr.rel (0) target = $region45
    $region44: #{qnetwork_forward.1} parent=1 // pred_region
      %s62 = ssub.s32 16, 16
      %63 = vsyncadd [#allocation4], %s62
      %s65 = sshll.u32 %s10, 4
      %s66 = int_to_ptr.vmem [resolvable:$true] %s65
      %68 = dma.vmem_to_smem %s66, 16, [#allocation7], [#allocation4]
    $region45: #{qnetwork_forward.1} parent=1 // pred_fallthru
      _
    // Predicated region
    $region46: #{qnetwork_forward.1} parent=1 // pred_check
      _
    $region47: #{qnetwork_forward.1} parent=1 // pred_check_branch
      %70 = sbr.rel (0) target = $region49
    $region48: #{qnetwork_forward.1} parent=1 // pred_region
      %71 = dma.done [#allocation3], 8192
    $region49: #{qnetwork_forward.1} parent=1 // pred_fallthru
      _
    // Predicated region
    $region50: #{qnetwork_forward.1} parent=1 // pred_check
      _
    $region51: #{qnetwork_forward.1} parent=1 // pred_check_branch
      %73 = sbr.rel (0) target = $region53
    $region52: #{qnetwork_forward.1} parent=1 // pred_region
      %74 = dma.done [#allocation6], 8192
    $region53: #{qnetwork_forward.1} parent=1 // pred_fallthru
      _
    // Predicated region
    $region54: #{qnetwork_forward.1} parent=1 // pred_check
      _
    $region55: #{qnetwork_forward.1} parent=1 // pred_check_branch
      %76 = sbr.rel (0) target = $region57
    $region56: #{qnetwork_forward.1} parent=1 // pred_region
      %77 = dma.done [#allocation4], 16
    $region57: #{qnetwork_forward.1} parent=1 // pred_fallthru
      _
    %78 = sfence
    %v80 = vld [vmem:[%s0] sm:$0xff]
    %v81 = vpack.c.bf16 %v80, %v80
    %v82 = vld [vmem:[%s1] sm:$0xff]
    %v83 = vpack.c.bf16 %v82, %v82
    %v84 = vld [vmem:[%s2] sm:$0x77]
    %v85 = vld [vmem:[%s3] sm:$0x3]
    %v88 = vunpack.c.l.s4 1966171168
    %v89 = vunpack.c.0.s8 %v88
    %v90 = vlaneseq
    %v91 = vshrl.u32 %v90, 7
    %v92 = vsub.s32 %v89, %v91
    %v93 = vrot.slane %v85, %v92
    %v94 = vcombine.high %v93, %v93
    %v96 = vunpack.c.l.s4 1966171168
    %v97 = vunpack.c.0.s8 %v96
    %v98 = vlaneseq
    %v99 = vshrl.u32 %v98, 7
    %v100 = vsub.s32 %v97, %v99
    %v101 = vrot.slane %v93, %v100
    %v103 = vunpack.c.l.s4 1966171168
    %v104 = vunpack.c.0.s8 %v103
    %v105 = vlaneseq
    %v106 = vshrl.u32 %v105, 7
    %v107 = vsub.s32 %v104, %v106
    %v108 = vrot.slane %v94, %v107
    %vm109 = vcmask 15360
    %v111 = vsel %vm109, %v83, 0
    %vm113 = vcmask 1040384
    %v115 = vsel %vm113, %v101, 0
    %v118 = vsel %vm113, %v108, 0
    %120 = vmatprep.subr.bf16.mxu0 %v118
    %121 = vmatpush1.bf16.msra.mxu0 %v115
    %122 = vmatprep.subr.bf16.mxu0 0
    %123 = vmatpush1.bf16.msra.mxu0 0
    %124 = vmatprep.subr.bf16.mxu0 0
    %125 = vmatpush1.bf16.msra.mxu0 0
    %126 = vmatprep.subr.bf16.mxu0 0
    %127 = vmatpush1.bf16.msra.mxu0 0
    %128 = vmatprep.subr.bf16.mxu0 0
    %129 = vmatpush1.bf16.msra.mxu0 0
    %130 = vmatprep.subr.bf16.mxu0 0
    %131 = vmatpush1.bf16.msra.mxu0 0
    %132 = vmatprep.subr.bf16.mxu0 0
    %133 = vmatpush1.bf16.msra.mxu0 0
    %134 = vmatprep.subr.bf16.mxu0 0
    %135 = vmatpush1.bf16.msra.mxu0 0
    %136 = vmatprep.subr.bf16.mxu0 0
    %137 = vmatpush1.bf16.msra.mxu0 0
    %138 = vmatprep.subr.bf16.mxu0 0
    %139 = vmatpush1.bf16.msra.mxu0 0
    %140 = vmatprep.subr.bf16.mxu0 0
    %141 = vmatpush1.bf16.msra.mxu0 0
    %142 = vmatprep.subr.bf16.mxu0 0
    %143 = vmatpush1.bf16.msra.mxu0 0
    %144 = vmatprep.subr.bf16.mxu0 0
    %145 = vmatpush1.bf16.msra.mxu0 0
    %146 = vmatprep.subr.bf16.mxu0 0
    %147 = vmatpush1.bf16.msra.mxu0 0
    %148 = vmatprep.subr.bf16.mxu0 0
    %149 = vmatpush1.bf16.msra.mxu0 0
    %150 = vmatprep.subr.bf16.mxu0 0
    %151 = vmatpush1.bf16.msra.mxu0 0
    %152 = vmatprep.mubr.bf16.mxu0 0
    %153 = vmatmul.mubr.bf16.gmra.mrb[0].mxu0 %v111
    %v154 = vpop.f32.mrb[0].mxu0
    %v155 = vadd.f32 0.0, %v154
    %v156 = vpop.f32.mrb[0].mxu0
    %v157 = vadd.f32 0.0, %v156
    %v158 = vpop.f32.mrb[0].mxu0
    %v159 = vpop.f32.mrb[0].mxu0
    %160 = vdwg.mxu0
    %v162 = vunpack.c.l.b16 %v84
    %v163 = vunpack.c.h.b16 %v84
    %v164 = vpack.c.b16 %v162, %v162
    %v165 = vpack.c.b16 %v163, %v163
    %vm166 = vcmask 48128
    %v168 = vsel %vm166, %v81, 0
    %vm170 = vcmask 1042432
    %v172 = vsel %vm170, %v164, 0
    %v175 = vsel %vm170, %v165, 0
    %177 = vmatprep.subr.bf16.mxu0 %v175
    %178 = vmatpush1.bf16.msra.mxu0 %v172
    %179 = vmatprep.subr.bf16.mxu0 0
    %180 = vmatpush1.bf16.msra.mxu0 0
    %181 = vmatprep.subr.bf16.mxu0 0
    %182 = vmatpush1.bf16.msra.mxu0 0
    %183 = vmatprep.subr.bf16.mxu0 0
    %184 = vmatpush1.bf16.msra.mxu0 0
    %185 = vmatprep.subr.bf16.mxu0 0
    %186 = vmatpush1.bf16.msra.mxu0 0
    %187 = vmatprep.subr.bf16.mxu0 0
    %188 = vmatpush1.bf16.msra.mxu0 0
    %189 = vmatprep.subr.bf16.mxu0 0
    %190 = vmatpush1.bf16.msra.mxu0 0
    %191 = vmatprep.subr.bf16.mxu0 0
    %192 = vmatpush1.bf16.msra.mxu0 0
    %193 = vmatprep.subr.bf16.mxu0 0
    %194 = vmatpush1.bf16.msra.mxu0 0
    %195 = vmatprep.subr.bf16.mxu0 0
    %196 = vmatpush1.bf16.msra.mxu0 0
    %197 = vmatprep.subr.bf16.mxu0 0
    %198 = vmatpush1.bf16.msra.mxu0 0
    %199 = vmatprep.subr.bf16.mxu0 0
    %200 = vmatpush1.bf16.msra.mxu0 0
    %201 = vmatprep.subr.bf16.mxu0 0
    %202 = vmatpush1.bf16.msra.mxu0 0
    %203 = vmatprep.subr.bf16.mxu0 0
    %204 = vmatpush1.bf16.msra.mxu0 0
    %205 = vmatprep.subr.bf16.mxu0 0
    %206 = vmatpush1.bf16.msra.mxu0 0
    %207 = vmatprep.subr.bf16.mxu0 0
    %208 = vmatpush1.bf16.msra.mxu0 0
    %209 = vmatprep.mubr.bf16.mxu0 0
    %210 = vmatmul.mubr.bf16.gmra.mrb[0].mxu0 %v168
    %v211 = vpop.f32.mrb[0].mxu0
    %v212 = vadd.f32 %v155, %v211
    %v213 = vpop.f32.mrb[0].mxu0
    %v214 = vadd.f32 %v157, %v213
    %v215 = vpop.f32.mrb[0].mxu0
    %v216 = vpop.f32.mrb[0].mxu0
    %217 = vdwg.mxu0
    %v218 = vld [vmem:[%s4] sm:$0x3]
    %v220 = vlaneseq
    %v221 = vshrl.u32 %v220, 7
    %v222 = vsub.s32 0, %v221
    %v223 = vrot.slane %v218, %v222
    %v224 = vlaneseq
    %v225 = vshrl.u32 %v224, 7
    %v226 = vsub.s32 1, %v225
    %v227 = vrot.slane %v218, %v226
    %v230 = vadd.f32 %v212, %v223
    %v231 = vadd.f32 %v214, %v227
    %v232 = vmax.f32 %v230, 0.0
    %v233 = vmax.f32 %v231, 0.0
    %v234 = vpack.c.bf16 %v232, %v232
    %v235 = vpack.c.bf16 %v233, %v233
    %v236 = vld [vmem:[#allocation2] sm:$0xff]
    %v237 = vld [vmem:[#allocation2 + $0x8] sm:$0xff]
    %v238 = vld [vmem:[#allocation2 + $0x10] sm:$0xff]
    %v239 = vld [vmem:[#allocation2 + $0x18] sm:$0xff]
    %v240 = vld [vmem:[#allocation2 + $0x20] sm:$0xff]
    %v241 = vld [vmem:[#allocation2 + $0x28] sm:$0xff]
    %v242 = vld [vmem:[#allocation2 + $0x30] sm:$0xff]
    %v243 = vld [vmem:[#allocation2 + $0x38] sm:$0xff]
    %v244 = vld [vmem:[#allocation2 + $0x40] sm:$0xff]
    %v245 = vld [vmem:[#allocation2 + $0x48] sm:$0xff]
    %v246 = vld [vmem:[#allocation2 + $0x50] sm:$0xff]
    %v247 = vld [vmem:[#allocation2 + $0x58] sm:$0xff]
    %v248 = vld [vmem:[#allocation2 + $0x60] sm:$0xff]
    %v249 = vld [vmem:[#allocation2 + $0x68] sm:$0xff]
    %v250 = vld [vmem:[#allocation2 + $0x70] sm:$0xff]
    %v251 = vld [vmem:[#allocation2 + $0x78] sm:$0xff]
    %v252 = vld [vmem:[#allocation2 + $0x80] sm:$0xff]
    %v253 = vld [vmem:[#allocation2 + $0x88] sm:$0xff]
    %v254 = vld [vmem:[#allocation2 + $0x90] sm:$0xff]
    %v255 = vld [vmem:[#allocation2 + $0x98] sm:$0xff]
    %v256 = vld [vmem:[#allocation2 + $0xa0] sm:$0xff]
    %v257 = vld [vmem:[#allocation2 + $0xa8] sm:$0xff]
    %v258 = vld [vmem:[#allocation2 + $0xb0] sm:$0xff]
    %v259 = vld [vmem:[#allocation2 + $0xb8] sm:$0xff]
    %v260 = vld [vmem:[#allocation2 + $0xc0] sm:$0xff]
    %v261 = vld [vmem:[#allocation2 + $0xc8] sm:$0xff]
    %v262 = vld [vmem:[#allocation2 + $0xd0] sm:$0xff]
    %v263 = vld [vmem:[#allocation2 + $0xd8] sm:$0xff]
    %v264 = vld [vmem:[#allocation2 + $0xe0] sm:$0xff]
    %v265 = vld [vmem:[#allocation2 + $0xe8] sm:$0xff]
    %v266 = vld [vmem:[#allocation2 + $0xf0] sm:$0xff]
    %v267 = vld [vmem:[#allocation2 + $0xf8] sm:$0xff]
    %v268 = vld [vmem:[%s6] sm:$0x3]
    %v270 = vlaneseq
    %v271 = vshrl.u32 %v270, 7
    %v272 = vsub.s32 0, %v271
    %v273 = vrot.slane %v268, %v272
    %v274 = vlaneseq
    %v275 = vshrl.u32 %v274, 7
    %v276 = vsub.s32 1, %v275
    %v277 = vrot.slane %v268, %v276
    %v312 = vunpack.c.l.b16 %v236
    %v313 = vunpack.c.h.b16 %v236
    %v314 = vunpack.c.l.b16 %v237
    %v315 = vunpack.c.h.b16 %v237
    %v316 = vunpack.c.l.b16 %v238
    %v317 = vunpack.c.h.b16 %v238
    %v318 = vunpack.c.l.b16 %v239
    %v319 = vunpack.c.h.b16 %v239
    %v320 = vunpack.c.l.b16 %v240
    %v321 = vunpack.c.h.b16 %v240
    %v322 = vunpack.c.l.b16 %v241
    %v323 = vunpack.c.h.b16 %v241
    %v324 = vunpack.c.l.b16 %v242
    %v325 = vunpack.c.h.b16 %v242
    %v326 = vunpack.c.l.b16 %v243
    %v327 = vunpack.c.h.b16 %v243
    %v328 = vunpack.c.l.b16 %v244
    %v329 = vunpack.c.h.b16 %v244
    %v330 = vunpack.c.l.b16 %v245
    %v331 = vunpack.c.h.b16 %v245
    %v332 = vunpack.c.l.b16 %v246
    %v333 = vunpack.c.h.b16 %v246
    %v334 = vunpack.c.l.b16 %v247
    %v335 = vunpack.c.h.b16 %v247
    %v336 = vunpack.c.l.b16 %v248
    %v337 = vunpack.c.h.b16 %v248
    %v338 = vunpack.c.l.b16 %v249
    %v339 = vunpack.c.h.b16 %v249
    %v340 = vunpack.c.l.b16 %v250
    %v341 = vunpack.c.h.b16 %v250
    %v342 = vunpack.c.l.b16 %v251
    %v343 = vunpack.c.h.b16 %v251
    %v344 = vunpack.c.l.b16 %v252
    %v345 = vunpack.c.h.b16 %v252
    %v346 = vunpack.c.l.b16 %v253
    %v347 = vunpack.c.h.b16 %v253
    %v348 = vunpack.c.l.b16 %v254
    %v349 = vunpack.c.h.b16 %v254
    %v350 = vunpack.c.l.b16 %v255
    %v351 = vunpack.c.h.b16 %v255
    %v352 = vunpack.c.l.b16 %v256
    %v353 = vunpack.c.h.b16 %v256
    %v354 = vunpack.c.l.b16 %v257
    %v355 = vunpack.c.h.b16 %v257
    %v356 = vunpack.c.l.b16 %v258
    %v357 = vunpack.c.h.b16 %v258
    %v358 = vunpack.c.l.b16 %v259
    %v359 = vunpack.c.h.b16 %v259
    %v360 = vunpack.c.l.b16 %v260
    %v361 = vunpack.c.h.b16 %v260
    %v362 = vunpack.c.l.b16 %v261
    %v363 = vunpack.c.h.b16 %v261
    %v364 = vunpack.c.l.b16 %v262
    %v365 = vunpack.c.h.b16 %v262
    %v366 = vunpack.c.l.b16 %v263
    %v367 = vunpack.c.h.b16 %v263
    %v368 = vunpack.c.l.b16 %v264
    %v369 = vunpack.c.h.b16 %v264
    %v370 = vunpack.c.l.b16 %v265
    %v371 = vunpack.c.h.b16 %v265
    %v372 = vunpack.c.l.b16 %v266
    %v373 = vunpack.c.h.b16 %v266
    %v374 = vunpack.c.l.b16 %v267
    %v375 = vunpack.c.h.b16 %v267
    %v376 = vpack.c.b16 %v314, %v312
    %v377 = vpack.c.b16 %v315, %v313
    %v378 = vpack.c.b16 %v318, %v316
    %v379 = vpack.c.b16 %v319, %v317
    %v380 = vpack.c.b16 %v322, %v320
    %v381 = vpack.c.b16 %v323, %v321
    %v382 = vpack.c.b16 %v326, %v324
    %v383 = vpack.c.b16 %v327, %v325
    %v384 = vpack.c.b16 %v330, %v328
    %v385 = vpack.c.b16 %v331, %v329
    %v386 = vpack.c.b16 %v334, %v332
    %v387 = vpack.c.b16 %v335, %v333
    %v388 = vpack.c.b16 %v338, %v336
    %v389 = vpack.c.b16 %v339, %v337
    %v390 = vpack.c.b16 %v342, %v340
    %v391 = vpack.c.b16 %v343, %v341
    %v392 = vpack.c.b16 %v346, %v344
    %v393 = vpack.c.b16 %v347, %v345
    %v394 = vpack.c.b16 %v350, %v348
    %v395 = vpack.c.b16 %v351, %v349
    %v396 = vpack.c.b16 %v354, %v352
    %v397 = vpack.c.b16 %v355, %v353
    %v398 = vpack.c.b16 %v358, %v356
    %v399 = vpack.c.b16 %v359, %v357
    %v400 = vpack.c.b16 %v362, %v360
    %v401 = vpack.c.b16 %v363, %v361
    %v402 = vpack.c.b16 %v366, %v364
    %v403 = vpack.c.b16 %v367, %v365
    %v404 = vpack.c.b16 %v370, %v368
    %v405 = vpack.c.b16 %v371, %v369
    %v406 = vpack.c.b16 %v374, %v372
    %v407 = vpack.c.b16 %v375, %v373
    %440 = vmatprep.subr.bf16.mxu0 %v377
    %441 = vmatpush1.bf16.msra.mxu0 %v376
    %442 = vmatprep.subr.bf16.mxu0 %v379
    %443 = vmatpush1.bf16.msra.mxu0 %v378
    %444 = vmatprep.subr.bf16.mxu0 %v381
    %445 = vmatpush1.bf16.msra.mxu0 %v380
    %446 = vmatprep.subr.bf16.mxu0 %v383
    %447 = vmatpush1.bf16.msra.mxu0 %v382
    %448 = vmatprep.subr.bf16.mxu0 %v385
    %449 = vmatpush1.bf16.msra.mxu0 %v384
    %450 = vmatprep.subr.bf16.mxu0 %v387
    %451 = vmatpush1.bf16.msra.mxu0 %v386
    %452 = vmatprep.subr.bf16.mxu0 %v389
    %453 = vmatpush1.bf16.msra.mxu0 %v388
    %454 = vmatprep.subr.bf16.mxu0 %v391
    %455 = vmatpush1.bf16.msra.mxu0 %v390
    %456 = vmatprep.subr.bf16.mxu0 %v393
    %457 = vmatpush1.bf16.msra.mxu0 %v392
    %458 = vmatprep.subr.bf16.mxu0 %v395
    %459 = vmatpush1.bf16.msra.mxu0 %v394
    %460 = vmatprep.subr.bf16.mxu0 %v397
    %461 = vmatpush1.bf16.msra.mxu0 %v396
    %462 = vmatprep.subr.bf16.mxu0 %v399
    %463 = vmatpush1.bf16.msra.mxu0 %v398
    %464 = vmatprep.subr.bf16.mxu0 %v401
    %465 = vmatpush1.bf16.msra.mxu0 %v400
    %466 = vmatprep.subr.bf16.mxu0 %v403
    %467 = vmatpush1.bf16.msra.mxu0 %v402
    %468 = vmatprep.subr.bf16.mxu0 %v405
    %469 = vmatpush1.bf16.msra.mxu0 %v404
    %470 = vmatprep.subr.bf16.mxu0 %v407
    %471 = vmatpush1.bf16.msra.mxu0 %v406
    %472 = vmatprep.mubr.bf16.mxu0 %v235
    %473 = vmatmul.mubr.bf16.gmra.mrb[0].mxu0 %v234
    %v474 = vpop.f32.mrb[0].mxu0
    %v475 = vadd.f32 %v273, %v474
    %v476 = vpop.f32.mrb[0].mxu0
    %v477 = vadd.f32 %v277, %v476
    %v478 = vpop.f32.mrb[0].mxu0
    %v479 = vpop.f32.mrb[0].mxu0
    %480 = vdwg.mxu0
    %v481 = vmax.f32 %v475, 0.0
    %v482 = vmax.f32 %v477, 0.0
    %v483 = vpack.c.bf16 %v481, %v481
    %v484 = vpack.c.bf16 %v482, %v482
    %v485 = vld [vmem:[#allocation5] sm:$0xff]
    %v486 = vld [vmem:[#allocation5 + $0x8] sm:$0xff]
    %v487 = vld [vmem:[#allocation5 + $0x10] sm:$0xff]
    %v488 = vld [vmem:[#allocation5 + $0x18] sm:$0xff]
    %v489 = vld [vmem:[#allocation5 + $0x20] sm:$0xff]
    %v490 = vld [vmem:[#allocation5 + $0x28] sm:$0xff]
    %v491 = vld [vmem:[#allocation5 + $0x30] sm:$0xff]
    %v492 = vld [vmem:[#allocation5 + $0x38] sm:$0xff]
    %v493 = vld [vmem:[#allocation5 + $0x40] sm:$0xff]
    %v494 = vld [vmem:[#allocation5 + $0x48] sm:$0xff]
    %v495 = vld [vmem:[#allocation5 + $0x50] sm:$0xff]
    %v496 = vld [vmem:[#allocation5 + $0x58] sm:$0xff]
    %v497 = vld [vmem:[#allocation5 + $0x60] sm:$0xff]
    %v498 = vld [vmem:[#allocation5 + $0x68] sm:$0xff]
    %v499 = vld [vmem:[#allocation5 + $0x70] sm:$0xff]
    %v500 = vld [vmem:[#allocation5 + $0x78] sm:$0xff]
    %v501 = vld [vmem:[#allocation5 + $0x80] sm:$0xff]
    %v502 = vld [vmem:[#allocation5 + $0x88] sm:$0xff]
    %v503 = vld [vmem:[#allocation5 + $0x90] sm:$0xff]
    %v504 = vld [vmem:[#allocation5 + $0x98] sm:$0xff]
    %v505 = vld [vmem:[#allocation5 + $0xa0] sm:$0xff]
    %v506 = vld [vmem:[#allocation5 + $0xa8] sm:$0xff]
    %v507 = vld [vmem:[#allocation5 + $0xb0] sm:$0xff]
    %v508 = vld [vmem:[#allocation5 + $0xb8] sm:$0xff]
    %v509 = vld [vmem:[#allocation5 + $0xc0] sm:$0xff]
    %v510 = vld [vmem:[#allocation5 + $0xc8] sm:$0xff]
    %v511 = vld [vmem:[#allocation5 + $0xd0] sm:$0xff]
    %v512 = vld [vmem:[#allocation5 + $0xd8] sm:$0xff]
    %v513 = vld [vmem:[#allocation5 + $0xe0] sm:$0xff]
    %v514 = vld [vmem:[#allocation5 + $0xe8] sm:$0xff]
    %v515 = vld [vmem:[#allocation5 + $0xf0] sm:$0xff]
    %v516 = vld [vmem:[#allocation5 + $0xf8] sm:$0xff]
    %v517 = vld [vmem:[%s8] sm:$0x3]
    %v519 = vlaneseq
    %v520 = vshrl.u32 %v519, 7
    %v521 = vsub.s32 0, %v520
    %v522 = vrot.slane %v517, %v521
    %v523 = vlaneseq
    %v524 = vshrl.u32 %v523, 7
    %v525 = vsub.s32 1, %v524
    %v526 = vrot.slane %v517, %v525
    %v561 = vunpack.c.l.b16 %v485
    %v562 = vunpack.c.h.b16 %v485
    %v563 = vunpack.c.l.b16 %v486
    %v564 = vunpack.c.h.b16 %v486
    %v565 = vunpack.c.l.b16 %v487
    %v566 = vunpack.c.h.b16 %v487
    %v567 = vunpack.c.l.b16 %v488
    %v568 = vunpack.c.h.b16 %v488
    %v569 = vunpack.c.l.b16 %v489
    %v570 = vunpack.c.h.b16 %v489
    %v571 = vunpack.c.l.b16 %v490
    %v572 = vunpack.c.h.b16 %v490
    %v573 = vunpack.c.l.b16 %v491
    %v574 = vunpack.c.h.b16 %v491
    %v575 = vunpack.c.l.b16 %v492
    %v576 = vunpack.c.h.b16 %v492
    %v577 = vunpack.c.l.b16 %v493
    %v578 = vunpack.c.h.b16 %v493
    %v579 = vunpack.c.l.b16 %v494
    %v580 = vunpack.c.h.b16 %v494
    %v581 = vunpack.c.l.b16 %v495
    %v582 = vunpack.c.h.b16 %v495
    %v583 = vunpack.c.l.b16 %v496
    %v584 = vunpack.c.h.b16 %v496
    %v585 = vunpack.c.l.b16 %v497
    %v586 = vunpack.c.h.b16 %v497
    %v587 = vunpack.c.l.b16 %v498
    %v588 = vunpack.c.h.b16 %v498
    %v589 = vunpack.c.l.b16 %v499
    %v590 = vunpack.c.h.b16 %v499
    %v591 = vunpack.c.l.b16 %v500
    %v592 = vunpack.c.h.b16 %v500
    %v593 = vunpack.c.l.b16 %v501
    %v594 = vunpack.c.h.b16 %v501
    %v595 = vunpack.c.l.b16 %v502
    %v596 = vunpack.c.h.b16 %v502
    %v597 = vunpack.c.l.b16 %v503
    %v598 = vunpack.c.h.b16 %v503
    %v599 = vunpack.c.l.b16 %v504
    %v600 = vunpack.c.h.b16 %v504
    %v601 = vunpack.c.l.b16 %v505
    %v602 = vunpack.c.h.b16 %v505
    %v603 = vunpack.c.l.b16 %v506
    %v604 = vunpack.c.h.b16 %v506
    %v605 = vunpack.c.l.b16 %v507
    %v606 = vunpack.c.h.b16 %v507
    %v607 = vunpack.c.l.b16 %v508
    %v608 = vunpack.c.h.b16 %v508
    %v609 = vunpack.c.l.b16 %v509
    %v610 = vunpack.c.h.b16 %v509
    %v611 = vunpack.c.l.b16 %v510
    %v612 = vunpack.c.h.b16 %v510
    %v613 = vunpack.c.l.b16 %v511
    %v614 = vunpack.c.h.b16 %v511
    %v615 = vunpack.c.l.b16 %v512
    %v616 = vunpack.c.h.b16 %v512
    %v617 = vunpack.c.l.b16 %v513
    %v618 = vunpack.c.h.b16 %v513
    %v619 = vunpack.c.l.b16 %v514
    %v620 = vunpack.c.h.b16 %v514
    %v621 = vunpack.c.l.b16 %v515
    %v622 = vunpack.c.h.b16 %v515
    %v623 = vunpack.c.l.b16 %v516
    %v624 = vunpack.c.h.b16 %v516
    %v625 = vpack.c.b16 %v563, %v561
    %v626 = vpack.c.b16 %v564, %v562
    %v627 = vpack.c.b16 %v567, %v565
    %v628 = vpack.c.b16 %v568, %v566
    %v629 = vpack.c.b16 %v571, %v569
    %v630 = vpack.c.b16 %v572, %v570
    %v631 = vpack.c.b16 %v575, %v573
    %v632 = vpack.c.b16 %v576, %v574
    %v633 = vpack.c.b16 %v579, %v577
    %v634 = vpack.c.b16 %v580, %v578
    %v635 = vpack.c.b16 %v583, %v581
    %v636 = vpack.c.b16 %v584, %v582
    %v637 = vpack.c.b16 %v587, %v585
    %v638 = vpack.c.b16 %v588, %v586
    %v639 = vpack.c.b16 %v591, %v589
    %v640 = vpack.c.b16 %v592, %v590
    %v641 = vpack.c.b16 %v595, %v593
    %v642 = vpack.c.b16 %v596, %v594
    %v643 = vpack.c.b16 %v599, %v597
    %v644 = vpack.c.b16 %v600, %v598
    %v645 = vpack.c.b16 %v603, %v601
    %v646 = vpack.c.b16 %v604, %v602
    %v647 = vpack.c.b16 %v607, %v605
    %v648 = vpack.c.b16 %v608, %v606
    %v649 = vpack.c.b16 %v611, %v609
    %v650 = vpack.c.b16 %v612, %v610
    %v651 = vpack.c.b16 %v615, %v613
    %v652 = vpack.c.b16 %v616, %v614
    %v653 = vpack.c.b16 %v619, %v617
    %v654 = vpack.c.b16 %v620, %v618
    %v655 = vpack.c.b16 %v623, %v621
    %v656 = vpack.c.b16 %v624, %v622
    %689 = vmatprep.subr.bf16.mxu0 %v626
    %690 = vmatpush1.bf16.msra.mxu0 %v625
    %691 = vmatprep.subr.bf16.mxu0 %v628
    %692 = vmatpush1.bf16.msra.mxu0 %v627
    %693 = vmatprep.subr.bf16.mxu0 %v630
    %694 = vmatpush1.bf16.msra.mxu0 %v629
    %695 = vmatprep.subr.bf16.mxu0 %v632
    %696 = vmatpush1.bf16.msra.mxu0 %v631
    %697 = vmatprep.subr.bf16.mxu0 %v634
    %698 = vmatpush1.bf16.msra.mxu0 %v633
    %699 = vmatprep.subr.bf16.mxu0 %v636
    %700 = vmatpush1.bf16.msra.mxu0 %v635
    %701 = vmatprep.subr.bf16.mxu0 %v638
    %702 = vmatpush1.bf16.msra.mxu0 %v637
    %703 = vmatprep.subr.bf16.mxu0 %v640
    %704 = vmatpush1.bf16.msra.mxu0 %v639
    %705 = vmatprep.subr.bf16.mxu0 %v642
    %706 = vmatpush1.bf16.msra.mxu0 %v641
    %707 = vmatprep.subr.bf16.mxu0 %v644
    %708 = vmatpush1.bf16.msra.mxu0 %v643
    %709 = vmatprep.subr.bf16.mxu0 %v646
    %710 = vmatpush1.bf16.msra.mxu0 %v645
    %711 = vmatprep.subr.bf16.mxu0 %v648
    %712 = vmatpush1.bf16.msra.mxu0 %v647
    %713 = vmatprep.subr.bf16.mxu0 %v650
    %714 = vmatpush1.bf16.msra.mxu0 %v649
    %715 = vmatprep.subr.bf16.mxu0 %v652
    %716 = vmatpush1.bf16.msra.mxu0 %v651
    %717 = vmatprep.subr.bf16.mxu0 %v654
    %718 = vmatpush1.bf16.msra.mxu0 %v653
    %719 = vmatprep.subr.bf16.mxu0 %v656
    %720 = vmatpush1.bf16.msra.mxu0 %v655
    %721 = vmatprep.mubr.bf16.mxu0 %v484
    %722 = vmatmul.mubr.bf16.gmra.mrb[0].mxu0 %v483
    %v723 = vpop.f32.mrb[0].mxu0
    %v724 = vadd.f32 %v522, %v723
    %v725 = vpop.f32.mrb[0].mxu0
    %v726 = vadd.f32 %v526, %v725
    %v727 = vpop.f32.mrb[0].mxu0
    %v728 = vpop.f32.mrb[0].mxu0
    %729 = vdwg.mxu0
    %v730 = vmax.f32 %v724, 0.0
    %v731 = vmax.f32 %v726, 0.0
    %v732 = vld [vmem:[%s9] sm:$0x3]
    %v734 = vlaneseq
    %v735 = vshrl.u32 %v734, 7
    %v736 = vsub.s32 0, %v735
    %v737 = vrot.slane %v732, %v736
    %v738 = vlaneseq
    %v739 = vshrl.u32 %v738, 7
    %v740 = vsub.s32 1, %v739
    %v741 = vrot.slane %v732, %v740
    %v744 = vmul.f32 %v730, %v737
    %v745 = vmul.f32 %v731, %v741
    %v746 = vadd.f32 %v744, %v745
    %747 = vadd.xlane.f32.xlu0 %v746
    %v748 = vpop.xlane.xlu0 %747
    %s749 = sld [smem:[#allocation7]]
    %v750 = vstv %s749
    %v751 = vadd.f32 %v748, %v750
    %vm752 = vcmask 7168
    %753 = vst.msk [vmem:[%s11] sm:$0xff] %vm752, %v751
    %s754 = scalar_lea.vmem %s2, 8
    %v755 = vld [vmem:[%s754] sm:$0x77]
    %s756 = scalar_lea.vmem %s3, 2
    %v757 = vld [vmem:[%s756] sm:$0x3]
    %v760 = vunpack.c.l.s4 1966171168
    %v761 = vunpack.c.0.s8 %v760
    %v762 = vlaneseq
    %v763 = vshrl.u32 %v762, 7
    %v764 = vsub.s32 %v761, %v763
    %v765 = vrot.slane %v757, %v764
    %v766 = vcombine.high %v765, %v765
    %v768 = vunpack.c.l.s4 1966171168
    %v769 = vunpack.c.0.s8 %v768
    %v770 = vlaneseq
    %v771 = vshrl.u32 %v770, 7
    %v772 = vsub.s32 %v769, %v771
    %v773 = vrot.slane %v765, %v772
    %v775 = vunpack.c.l.s4 1966171168
    %v776 = vunpack.c.0.s8 %v775
    %v777 = vlaneseq
    %v778 = vshrl.u32 %v777, 7
    %v779 = vsub.s32 %v776, %v778
    %v780 = vrot.slane %v766, %v779
    %v782 = vsel %vm113, %v773, 0
    %v785 = vsel %vm113, %v780, 0
    %787 = vmatprep.subr.bf16.mxu0 %v785
    %788 = vmatpush1.bf16.msra.mxu0 %v782
    %789 = vmatprep.subr.bf16.mxu0 0
    %790 = vmatpush1.bf16.msra.mxu0 0
    %791 = vmatprep.subr.bf16.mxu0 0
    %792 = vmatpush1.bf16.msra.mxu0 0
    %793 = vmatprep.subr.bf16.mxu0 0
    %794 = vmatpush1.bf16.msra.mxu0 0
    %795 = vmatprep.subr.bf16.mxu0 0
    %796 = vmatpush1.bf16.msra.mxu0 0
    %797 = vmatprep.subr.bf16.mxu0 0
    %798 = vmatpush1.bf16.msra.mxu0 0
    %799 = vmatprep.subr.bf16.mxu0 0
    %800 = vmatpush1.bf16.msra.mxu0 0
    %801 = vmatprep.subr.bf16.mxu0 0
    %802 = vmatpush1.bf16.msra.mxu0 0
    %803 = vmatprep.subr.bf16.mxu0 0
    %804 = vmatpush1.bf16.msra.mxu0 0
    %805 = vmatprep.subr.bf16.mxu0 0
    %806 = vmatpush1.bf16.msra.mxu0 0
    %807 = vmatprep.subr.bf16.mxu0 0
    %808 = vmatpush1.bf16.msra.mxu0 0
    %809 = vmatprep.subr.bf16.mxu0 0
    %810 = vmatpush1.bf16.msra.mxu0 0
    %811 = vmatprep.subr.bf16.mxu0 0
    %812 = vmatpush1.bf16.msra.mxu0 0
    %813 = vmatprep.subr.bf16.mxu0 0
    %814 = vmatpush1.bf16.msra.mxu0 0
    %815 = vmatprep.subr.bf16.mxu0 0
    %816 = vmatpush1.bf16.msra.mxu0 0
    %817 = vmatprep.subr.bf16.mxu0 0
    %818 = vmatpush1.bf16.msra.mxu0 0
    %819 = vmatprep.mubr.bf16.mxu0 0
    %820 = vmatmul.mubr.bf16.gmra.mrb[0].mxu0 %v111
    %v821 = vpop.f32.mrb[0].mxu0
    %v822 = vadd.f32 0.0, %v821
    %v823 = vpop.f32.mrb[0].mxu0
    %v824 = vadd.f32 0.0, %v823
    %v825 = vpop.f32.mrb[0].mxu0
    %v826 = vpop.f32.mrb[0].mxu0
    %827 = vdwg.mxu0
    %v829 = vunpack.c.l.b16 %v755
    %v830 = vunpack.c.h.b16 %v755
    %v831 = vpack.c.b16 %v829, %v829
    %v832 = vpack.c.b16 %v830, %v830
    %v834 = vsel %vm170, %v831, 0
    %v837 = vsel %vm170, %v832, 0
    %839 = vmatprep.subr.bf16.mxu0 %v837
    %840 = vmatpush1.bf16.msra.mxu0 %v834
    %841 = vmatprep.subr.bf16.mxu0 0
    %842 = vmatpush1.bf16.msra.mxu0 0
    %843 = vmatprep.subr.bf16.mxu0 0
    %844 = vmatpush1.bf16.msra.mxu0 0
    %845 = vmatprep.subr.bf16.mxu0 0
    %846 = vmatpush1.bf16.msra.mxu0 0
    %847 = vmatprep.subr.bf16.mxu0 0
    %848 = vmatpush1.bf16.msra.mxu0 0
    %849 = vmatprep.subr.bf16.mxu0 0
    %850 = vmatpush1.bf16.msra.mxu0 0
    %851 = vmatprep.subr.bf16.mxu0 0
    %852 = vmatpush1.bf16.msra.mxu0 0
    %853 = vmatprep.subr.bf16.mxu0 0
    %854 = vmatpush1.bf16.msra.mxu0 0
    %855 = vmatprep.subr.bf16.mxu0 0
    %856 = vmatpush1.bf16.msra.mxu0 0
    %857 = vmatprep.subr.bf16.mxu0 0
    %858 = vmatpush1.bf16.msra.mxu0 0
    %859 = vmatprep.subr.bf16.mxu0 0
    %860 = vmatpush1.bf16.msra.mxu0 0
    %861 = vmatprep.subr.bf16.mxu0 0
    %862 = vmatpush1.bf16.msra.mxu0 0
    %863 = vmatprep.subr.bf16.mxu0 0
    %864 = vmatpush1.bf16.msra.mxu0 0
    %865 = vmatprep.subr.bf16.mxu0 0
    %866 = vmatpush1.bf16.msra.mxu0 0
    %867 = vmatprep.subr.bf16.mxu0 0
    %868 = vmatpush1.bf16.msra.mxu0 0
    %869 = vmatprep.subr.bf16.mxu0 0
    %870 = vmatpush1.bf16.msra.mxu0 0
    %871 = vmatprep.mubr.bf16.mxu0 0
    %872 = vmatmul.mubr.bf16.gmra.mrb[0].mxu0 %v168
    %v873 = vpop.f32.mrb[0].mxu0
    %v874 = vadd.f32 %v822, %v873
    %v875 = vpop.f32.mrb[0].mxu0
    %v876 = vadd.f32 %v824, %v875
    %v877 = vpop.f32.mrb[0].mxu0
    %v878 = vpop.f32.mrb[0].mxu0
    %879 = vdwg.mxu0
    %s880 = scalar_lea.vmem %s4, 2
    %v881 = vld [vmem:[%s880] sm:$0x3]
    %v883 = vlaneseq
    %v884 = vshrl.u32 %v883, 7
    %v885 = vsub.s32 0, %v884
    %v886 = vrot.slane %v881, %v885
    %v887 = vlaneseq
    %v888 = vshrl.u32 %v887, 7
    %v889 = vsub.s32 1, %v888
    %v890 = vrot.slane %v881, %v889
    %v893 = vadd.f32 %v874, %v886
    %v894 = vadd.f32 %v876, %v890
    %v895 = vmax.f32 %v893, 0.0
    %v896 = vmax.f32 %v894, 0.0
    %v897 = vpack.c.bf16 %v895, %v895
    %v898 = vpack.c.bf16 %v896, %v896
    %s899 = scalar_lea.vmem [#allocation2], 256
    %v900 = vld [vmem:[%s899] sm:$0xff]
    %v901 = vld [vmem:[%s899 + $0x8] sm:$0xff]
    %v902 = vld [vmem:[%s899 + $0x10] sm:$0xff]
    %v903 = vld [vmem:[%s899 + $0x18] sm:$0xff]
    %v904 = vld [vmem:[%s899 + $0x20] sm:$0xff]
    %v905 = vld [vmem:[%s899 + $0x28] sm:$0xff]
    %v906 = vld [vmem:[%s899 + $0x30] sm:$0xff]
    %v907 = vld [vmem:[%s899 + $0x38] sm:$0xff]
    %v908 = vld [vmem:[%s899 + $0x40] sm:$0xff]
    %v909 = vld [vmem:[%s899 + $0x48] sm:$0xff]
    %v910 = vld [vmem:[%s899 + $0x50] sm:$0xff]
    %v911 = vld [vmem:[%s899 + $0x58] sm:$0xff]
    %v912 = vld [vmem:[%s899 + $0x60] sm:$0xff]
    %v913 = vld [vmem:[%s899 + $0x68] sm:$0xff]
    %v914 = vld [vmem:[%s899 + $0x70] sm:$0xff]
    %v915 = vld [vmem:[%s899 + $0x78] sm:$0xff]
    %v916 = vld [vmem:[%s899 + $0x80] sm:$0xff]
    %v917 = vld [vmem:[%s899 + $0x88] sm:$0xff]
    %v918 = vld [vmem:[%s899 + $0x90] sm:$0xff]
    %v919 = vld [vmem:[%s899 + $0x98] sm:$0xff]
    %v920 = vld [vmem:[%s899 + $0xa0] sm:$0xff]
    %v921 = vld [vmem:[%s899 + $0xa8] sm:$0xff]
    %v922 = vld [vmem:[%s899 + $0xb0] sm:$0xff]
    %v923 = vld [vmem:[%s899 + $0xb8] sm:$0xff]
    %v924 = vld [vmem:[%s899 + $0xc0] sm:$0xff]
    %v925 = vld [vmem:[%s899 + $0xc8] sm:$0xff]
    %v926 = vld [vmem:[%s899 + $0xd0] sm:$0xff]
    %v927 = vld [vmem:[%s899 + $0xd8] sm:$0xff]
    %v928 = vld [vmem:[%s899 + $0xe0] sm:$0xff]
    %v929 = vld [vmem:[%s899 + $0xe8] sm:$0xff]
    %v930 = vld [vmem:[%s899 + $0xf0] sm:$0xff]
    %v931 = vld [vmem:[%s899 + $0xf8] sm:$0xff]
    %s932 = scalar_lea.vmem %s6, 2
    %v933 = vld [vmem:[%s932] sm:$0x3]
    %v935 = vlaneseq
    %v936 = vshrl.u32 %v935, 7
    %v937 = vsub.s32 0, %v936
    %v938 = vrot.slane %v933, %v937
    %v939 = vlaneseq
    %v940 = vshrl.u32 %v939, 7
    %v941 = vsub.s32 1, %v940
    %v942 = vrot.slane %v933, %v941
    %v977 = vunpack.c.l.b16 %v900
    %v978 = vunpack.c.h.b16 %v900
    %v979 = vunpack.c.l.b16 %v901
    %v980 = vunpack.c.h.b16 %v901
    %v981 = vunpack.c.l.b16 %v902
    %v982 = vunpack.c.h.b16 %v902
    %v983 = vunpack.c.l.b16 %v903
    %v984 = vunpack.c.h.b16 %v903
    %v985 = vunpack.c.l.b16 %v904
    %v986 = vunpack.c.h.b16 %v904
    %v987 = vunpack.c.l.b16 %v905
    %v988 = vunpack.c.h.b16 %v905
    %v989 = vunpack.c.l.b16 %v906
    %v990 = vunpack.c.h.b16 %v906
    %v991 = vunpack.c.l.b16 %v907
    %v992 = vunpack.c.h.b16 %v907
    %v993 = vunpack.c.l.b16 %v908
    %v994 = vunpack.c.h.b16 %v908
    %v995 = vunpack.c.l.b16 %v909
    %v996 = vunpack.c.h.b16 %v909
    %v997 = vunpack.c.l.b16 %v910
    %v998 = vunpack.c.h.b16 %v910
    %v999 = vunpack.c.l.b16 %v911
    %v1000 = vunpack.c.h.b16 %v911
    %v1001 = vunpack.c.l.b16 %v912
    %v1002 = vunpack.c.h.b16 %v912
    %v1003 = vunpack.c.l.b16 %v913
    %v1004 = vunpack.c.h.b16 %v913
    %v1005 = vunpack.c.l.b16 %v914
    %v1006 = vunpack.c.h.b16 %v914
    %v1007 = vunpack.c.l.b16 %v915
    %v1008 = vunpack.c.h.b16 %v915
    %v1009 = vunpack.c.l.b16 %v916
    %v1010 = vunpack.c.h.b16 %v916
    %v1011 = vunpack.c.l.b16 %v917
    %v1012 = vunpack.c.h.b16 %v917
    %v1013 = vunpack.c.l.b16 %v918
    %v1014 = vunpack.c.h.b16 %v918
    %v1015 = vunpack.c.l.b16 %v919
    %v1016 = vunpack.c.h.b16 %v919
    %v1017 = vunpack.c.l.b16 %v920
    %v1018 = vunpack.c.h.b16 %v920
    %v1019 = vunpack.c.l.b16 %v921
    %v1020 = vunpack.c.h.b16 %v921
    %v1021 = vunpack.c.l.b16 %v922
    %v1022 = vunpack.c.h.b16 %v922
    %v1023 = vunpack.c.l.b16 %v923
    %v1024 = vunpack.c.h.b16 %v923
    %v1025 = vunpack.c.l.b16 %v924
    %v1026 = vunpack.c.h.b16 %v924
    %v1027 = vunpack.c.l.b16 %v925
    %v1028 = vunpack.c.h.b16 %v925
    %v1029 = vunpack.c.l.b16 %v926
    %v1030 = vunpack.c.h.b16 %v926
    %v1031 = vunpack.c.l.b16 %v927
    %v1032 = vunpack.c.h.b16 %v927
    %v1033 = vunpack.c.l.b16 %v928
    %v1034 = vunpack.c.h.b16 %v928
    %v1035 = vunpack.c.l.b16 %v929
    %v1036 = vunpack.c.h.b16 %v929
    %v1037 = vunpack.c.l.b16 %v930
    %v1038 = vunpack.c.h.b16 %v930
    %v1039 = vunpack.c.l.b16 %v931
    %v1040 = vunpack.c.h.b16 %v931
    %v1041 = vpack.c.b16 %v979, %v977
    %v1042 = vpack.c.b16 %v980, %v978
    %v1043 = vpack.c.b16 %v983, %v981
    %v1044 = vpack.c.b16 %v984, %v982
    %v1045 = vpack.c.b16 %v987, %v985
    %v1046 = vpack.c.b16 %v988, %v986
    %v1047 = vpack.c.b16 %v991, %v989
    %v1048 = vpack.c.b16 %v992, %v990
    %v1049 = vpack.c.b16 %v995, %v993
    %v1050 = vpack.c.b16 %v996, %v994
    %v1051 = vpack.c.b16 %v999, %v997
    %v1052 = vpack.c.b16 %v1000, %v998
    %v1053 = vpack.c.b16 %v1003, %v1001
    %v1054 = vpack.c.b16 %v1004, %v1002
    %v1055 = vpack.c.b16 %v1007, %v1005
    %v1056 = vpack.c.b16 %v1008, %v1006
    %v1057 = vpack.c.b16 %v1011, %v1009
    %v1058 = vpack.c.b16 %v1012, %v1010
    %v1059 = vpack.c.b16 %v1015, %v1013
    %v1060 = vpack.c.b16 %v1016, %v1014
    %v1061 = vpack.c.b16 %v1019, %v1017
    %v1062 = vpack.c.b16 %v1020, %v1018
    %v1063 = vpack.c.b16 %v1023, %v1021
    %v1064 = vpack.c.b16 %v1024, %v1022
    %v1065 = vpack.c.b16 %v1027, %v1025
    %v1066 = vpack.c.b16 %v1028, %v1026
    %v1067 = vpack.c.b16 %v1031, %v1029
    %v1068 = vpack.c.b16 %v1032, %v1030
    %v1069 = vpack.c.b16 %v1035, %v1033
    %v1070 = vpack.c.b16 %v1036, %v1034
    %v1071 = vpack.c.b16 %v1039, %v1037
    %v1072 = vpack.c.b16 %v1040, %v1038
    %1105 = vmatprep.subr.bf16.mxu0 %v1042
    %1106 = vmatpush1.bf16.msra.mxu0 %v1041
    %1107 = vmatprep.subr.bf16.mxu0 %v1044
    %1108 = vmatpush1.bf16.msra.mxu0 %v1043
    %1109 = vmatprep.subr.bf16.mxu0 %v1046
    %1110 = vmatpush1.bf16.msra.mxu0 %v1045
    %1111 = vmatprep.subr.bf16.mxu0 %v1048
    %1112 = vmatpush1.bf16.msra.mxu0 %v1047
    %1113 = vmatprep.subr.bf16.mxu0 %v1050
    %1114 = vmatpush1.bf16.msra.mxu0 %v1049
    %1115 = vmatprep.subr.bf16.mxu0 %v1052
    %1116 = vmatpush1.bf16.msra.mxu0 %v1051
    %1117 = vmatprep.subr.bf16.mxu0 %v1054
    %1118 = vmatpush1.bf16.msra.mxu0 %v1053
    %1119 = vmatprep.subr.bf16.mxu0 %v1056
    %1120 = vmatpush1.bf16.msra.mxu0 %v1055
    %1121 = vmatprep.subr.bf16.mxu0 %v1058
    %1122 = vmatpush1.bf16.msra.mxu0 %v1057
    %1123 = vmatprep.subr.bf16.mxu0 %v1060
    %1124 = vmatpush1.bf16.msra.mxu0 %v1059
    %1125 = vmatprep.subr.bf16.mxu0 %v1062
    %1126 = vmatpush1.bf16.msra.mxu0 %v1061
    %1127 = vmatprep.subr.bf16.mxu0 %v1064
    %1128 = vmatpush1.bf16.msra.mxu0 %v1063
    %1129 = vmatprep.subr.bf16.mxu0 %v1066
    %1130 = vmatpush1.bf16.msra.mxu0 %v1065
    %1131 = vmatprep.subr.bf16.mxu0 %v1068
    %1132 = vmatpush1.bf16.msra.mxu0 %v1067
    %1133 = vmatprep.subr.bf16.mxu0 %v1070
    %1134 = vmatpush1.bf16.msra.mxu0 %v1069
    %1135 = vmatprep.subr.bf16.mxu0 %v1072
    %1136 = vmatpush1.bf16.msra.mxu0 %v1071
    %1137 = vmatprep.mubr.bf16.mxu0 %v898
    %1138 = vmatmul.mubr.bf16.gmra.mrb[0].mxu0 %v897
    %v1139 = vpop.f32.mrb[0].mxu0
    %v1140 = vadd.f32 %v938, %v1139
    %v1141 = vpop.f32.mrb[0].mxu0
    %v1142 = vadd.f32 %v942, %v1141
    %v1143 = vpop.f32.mrb[0].mxu0
    %v1144 = vpop.f32.mrb[0].mxu0
    %1145 = vdwg.mxu0
    %v1146 = vmax.f32 %v1140, 0.0
    %v1147 = vmax.f32 %v1142, 0.0
    %v1148 = vpack.c.bf16 %v1146, %v1146
    %v1149 = vpack.c.bf16 %v1147, %v1147
    %s1150 = scalar_lea.vmem [#allocation5], 256
    %v1151 = vld [vmem:[%s1150] sm:$0xff]
    %v1152 = vld [vmem:[%s1150 + $0x8] sm:$0xff]
    %v1153 = vld [vmem:[%s1150 + $0x10] sm:$0xff]
    %v1154 = vld [vmem:[%s1150 + $0x18] sm:$0xff]
    %v1155 = vld [vmem:[%s1150 + $0x20] sm:$0xff]
    %v1156 = vld [vmem:[%s1150 + $0x28] sm:$0xff]
    %v1157 = vld [vmem:[%s1150 + $0x30] sm:$0xff]
    %v1158 = vld [vmem:[%s1150 + $0x38] sm:$0xff]
    %v1159 = vld [vmem:[%s1150 + $0x40] sm:$0xff]
    %v1160 = vld [vmem:[%s1150 + $0x48] sm:$0xff]
    %v1161 = vld [vmem:[%s1150 + $0x50] sm:$0xff]
    %v1162 = vld [vmem:[%s1150 + $0x58] sm:$0xff]
    %v1163 = vld [vmem:[%s1150 + $0x60] sm:$0xff]
    %v1164 = vld [vmem:[%s1150 + $0x68] sm:$0xff]
    %v1165 = vld [vmem:[%s1150 + $0x70] sm:$0xff]
    %v1166 = vld [vmem:[%s1150 + $0x78] sm:$0xff]
    %v1167 = vld [vmem:[%s1150 + $0x80] sm:$0xff]
    %v1168 = vld [vmem:[%s1150 + $0x88] sm:$0xff]
    %v1169 = vld [vmem:[%s1150 + $0x90] sm:$0xff]
    %v1170 = vld [vmem:[%s1150 + $0x98] sm:$0xff]
    %v1171 = vld [vmem:[%s1150 + $0xa0] sm:$0xff]
    %v1172 = vld [vmem:[%s1150 + $0xa8] sm:$0xff]
    %v1173 = vld [vmem:[%s1150 + $0xb0] sm:$0xff]
    %v1174 = vld [vmem:[%s1150 + $0xb8] sm:$0xff]
    %v1175 = vld [vmem:[%s1150 + $0xc0] sm:$0xff]
    %v1176 = vld [vmem:[%s1150 + $0xc8] sm:$0xff]
    %v1177 = vld [vmem:[%s1150 + $0xd0] sm:$0xff]
    %v1178 = vld [vmem:[%s1150 + $0xd8] sm:$0xff]
    %v1179 = vld [vmem:[%s1150 + $0xe0] sm:$0xff]
    %v1180 = vld [vmem:[%s1150 + $0xe8] sm:$0xff]
    %v1181 = vld [vmem:[%s1150 + $0xf0] sm:$0xff]
    %v1182 = vld [vmem:[%s1150 + $0xf8] sm:$0xff]
    %s1183 = scalar_lea.vmem %s8, 2
    %v1184 = vld [vmem:[%s1183] sm:$0x3]
    %v1186 = vlaneseq
    %v1187 = vshrl.u32 %v1186, 7
    %v1188 = vsub.s32 0, %v1187
    %v1189 = vrot.slane %v1184, %v1188
    %v1190 = vlaneseq
    %v1191 = vshrl.u32 %v1190, 7
    %v1192 = vsub.s32 1, %v1191
    %v1193 = vrot.slane %v1184, %v1192
    %v1228 = vunpack.c.l.b16 %v1151
    %v1229 = vunpack.c.h.b16 %v1151
    %v1230 = vunpack.c.l.b16 %v1152
    %v1231 = vunpack.c.h.b16 %v1152
    %v1232 = vunpack.c.l.b16 %v1153
    %v1233 = vunpack.c.h.b16 %v1153
    %v1234 = vunpack.c.l.b16 %v1154
    %v1235 = vunpack.c.h.b16 %v1154
    %v1236 = vunpack.c.l.b16 %v1155
    %v1237 = vunpack.c.h.b16 %v1155
    %v1238 = vunpack.c.l.b16 %v1156
    %v1239 = vunpack.c.h.b16 %v1156
    %v1240 = vunpack.c.l.b16 %v1157
    %v1241 = vunpack.c.h.b16 %v1157
    %v1242 = vunpack.c.l.b16 %v1158
    %v1243 = vunpack.c.h.b16 %v1158
    %v1244 = vunpack.c.l.b16 %v1159
    %v1245 = vunpack.c.h.b16 %v1159
    %v1246 = vunpack.c.l.b16 %v1160
    %v1247 = vunpack.c.h.b16 %v1160
    %v1248 = vunpack.c.l.b16 %v1161
    %v1249 = vunpack.c.h.b16 %v1161
    %v1250 = vunpack.c.l.b16 %v1162
    %v1251 = vunpack.c.h.b16 %v1162
    %v1252 = vunpack.c.l.b16 %v1163
    %v1253 = vunpack.c.h.b16 %v1163
    %v1254 = vunpack.c.l.b16 %v1164
    %v1255 = vunpack.c.h.b16 %v1164
    %v1256 = vunpack.c.l.b16 %v1165
    %v1257 = vunpack.c.h.b16 %v1165
    %v1258 = vunpack.c.l.b16 %v1166
    %v1259 = vunpack.c.h.b16 %v1166
    %v1260 = vunpack.c.l.b16 %v1167
    %v1261 = vunpack.c.h.b16 %v1167
    %v1262 = vunpack.c.l.b16 %v1168
    %v1263 = vunpack.c.h.b16 %v1168
    %v1264 = vunpack.c.l.b16 %v1169
    %v1265 = vunpack.c.h.b16 %v1169
    %v1266 = vunpack.c.l.b16 %v1170
    %v1267 = vunpack.c.h.b16 %v1170
    %v1268 = vunpack.c.l.b16 %v1171
    %v1269 = vunpack.c.h.b16 %v1171
    %v1270 = vunpack.c.l.b16 %v1172
    %v1271 = vunpack.c.h.b16 %v1172
    %v1272 = vunpack.c.l.b16 %v1173
    %v1273 = vunpack.c.h.b16 %v1173
    %v1274 = vunpack.c.l.b16 %v1174
    %v1275 = vunpack.c.h.b16 %v1174
    %v1276 = vunpack.c.l.b16 %v1175
    %v1277 = vunpack.c.h.b16 %v1175
    %v1278 = vunpack.c.l.b16 %v1176
    %v1279 = vunpack.c.h.b16 %v1176
    %v1280 = vunpack.c.l.b16 %v1177
    %v1281 = vunpack.c.h.b16 %v1177
    %v1282 = vunpack.c.l.b16 %v1178
    %v1283 = vunpack.c.h.b16 %v1178
    %v1284 = vunpack.c.l.b16 %v1179
    %v1285 = vunpack.c.h.b16 %v1179
    %v1286 = vunpack.c.l.b16 %v1180
    %v1287 = vunpack.c.h.b16 %v1180
    %v1288 = vunpack.c.l.b16 %v1181
    %v1289 = vunpack.c.h.b16 %v1181
    %v1290 = vunpack.c.l.b16 %v1182
    %v1291 = vunpack.c.h.b16 %v1182
    %v1292 = vpack.c.b16 %v1230, %v1228
    %v1293 = vpack.c.b16 %v1231, %v1229
    %v1294 = vpack.c.b16 %v1234, %v1232
    %v1295 = vpack.c.b16 %v1235, %v1233
    %v1296 = vpack.c.b16 %v1238, %v1236
    %v1297 = vpack.c.b16 %v1239, %v1237
    %v1298 = vpack.c.b16 %v1242, %v1240
    %v1299 = vpack.c.b16 %v1243, %v1241
    %v1300 = vpack.c.b16 %v1246, %v1244
    %v1301 = vpack.c.b16 %v1247, %v1245
    %v1302 = vpack.c.b16 %v1250, %v1248
    %v1303 = vpack.c.b16 %v1251, %v1249
    %v1304 = vpack.c.b16 %v1254, %v1252
    %v1305 = vpack.c.b16 %v1255, %v1253
    %v1306 = vpack.c.b16 %v1258, %v1256
    %v1307 = vpack.c.b16 %v1259, %v1257
    %v1308 = vpack.c.b16 %v1262, %v1260
    %v1309 = vpack.c.b16 %v1263, %v1261
    %v1310 = vpack.c.b16 %v1266, %v1264
    %v1311 = vpack.c.b16 %v1267, %v1265
    %v1312 = vpack.c.b16 %v1270, %v1268
    %v1313 = vpack.c.b16 %v1271, %v1269
    %v1314 = vpack.c.b16 %v1274, %v1272
    %v1315 = vpack.c.b16 %v1275, %v1273
    %v1316 = vpack.c.b16 %v1278, %v1276
    %v1317 = vpack.c.b16 %v1279, %v1277
    %v1318 = vpack.c.b16 %v1282, %v1280
    %v1319 = vpack.c.b16 %v1283, %v1281
    %v1320 = vpack.c.b16 %v1286, %v1284
    %v1321 = vpack.c.b16 %v1287, %v1285
    %v1322 = vpack.c.b16 %v1290, %v1288
    %v1323 = vpack.c.b16 %v1291, %v1289
    %1356 = vmatprep.subr.bf16.mxu0 %v1293
    %1357 = vmatpush1.bf16.msra.mxu0 %v1292
    %1358 = vmatprep.subr.bf16.mxu0 %v1295
    %1359 = vmatpush1.bf16.msra.mxu0 %v1294
    %1360 = vmatprep.subr.bf16.mxu0 %v1297
    %1361 = vmatpush1.bf16.msra.mxu0 %v1296
    %1362 = vmatprep.subr.bf16.mxu0 %v1299
    %1363 = vmatpush1.bf16.msra.mxu0 %v1298
    %1364 = vmatprep.subr.bf16.mxu0 %v1301
    %1365 = vmatpush1.bf16.msra.mxu0 %v1300
    %1366 = vmatprep.subr.bf16.mxu0 %v1303
    %1367 = vmatpush1.bf16.msra.mxu0 %v1302
    %1368 = vmatprep.subr.bf16.mxu0 %v1305
    %1369 = vmatpush1.bf16.msra.mxu0 %v1304
    %1370 = vmatprep.subr.bf16.mxu0 %v1307
    %1371 = vmatpush1.bf16.msra.mxu0 %v1306
    %1372 = vmatprep.subr.bf16.mxu0 %v1309
    %1373 = vmatpush1.bf16.msra.mxu0 %v1308
    %1374 = vmatprep.subr.bf16.mxu0 %v1311
    %1375 = vmatpush1.bf16.msra.mxu0 %v1310
    %1376 = vmatprep.subr.bf16.mxu0 %v1313
    %1377 = vmatpush1.bf16.msra.mxu0 %v1312
    %1378 = vmatprep.subr.bf16.mxu0 %v1315
    %1379 = vmatpush1.bf16.msra.mxu0 %v1314
    %1380 = vmatprep.subr.bf16.mxu0 %v1317
    %1381 = vmatpush1.bf16.msra.mxu0 %v1316
    %1382 = vmatprep.subr.bf16.mxu0 %v1319
    %1383 = vmatpush1.bf16.msra.mxu0 %v1318
    %1384 = vmatprep.subr.bf16.mxu0 %v1321
    %1385 = vmatpush1.bf16.msra.mxu0 %v1320
    %1386 = vmatprep.subr.bf16.mxu0 %v1323
    %1387 = vmatpush1.bf16.msra.mxu0 %v1322
    %1388 = vmatprep.mubr.bf16.mxu0 %v1149
    %1389 = vmatmul.mubr.bf16.gmra.mrb[0].mxu0 %v1148
    %v1390 = vpop.f32.mrb[0].mxu0
    %v1391 = vadd.f32 %v1189, %v1390
    %v1392 = vpop.f32.mrb[0].mxu0
    %v1393 = vadd.f32 %v1193, %v1392
    %v1394 = vpop.f32.mrb[0].mxu0
    %v1395 = vpop.f32.mrb[0].mxu0
    %1396 = vdwg.mxu0
    %v1397 = vmax.f32 %v1391, 0.0
    %v1398 = vmax.f32 %v1393, 0.0
    %s1399 = scalar_lea.vmem %s9, 2
    %v1400 = vld [vmem:[%s1399] sm:$0x3]
    %v1402 = vlaneseq
    %v1403 = vshrl.u32 %v1402, 7
    %v1404 = vsub.s32 0, %v1403
    %v1405 = vrot.slane %v1400, %v1404
    %v1406 = vlaneseq
    %v1407 = vshrl.u32 %v1406, 7
    %v1408 = vsub.s32 1, %v1407
    %v1409 = vrot.slane %v1400, %v1408
    %v1412 = vmul.f32 %v1397, %v1405
    %v1413 = vmul.f32 %v1398, %v1409
    %v1414 = vadd.f32 %v1412, %v1413
    %1415 = vadd.xlane.f32.xlu0 %v1414
    %v1416 = vpop.xlane.xlu0 %1415
    %s1417 = sld [smem:[#allocation7 + $0x1]]
    %v1418 = vstv %s1417
    %v1419 = vadd.f32 %v1416, %v1418
    %s1420 = scalar_lea.vmem %s11, 8
    %1421 = vst.msk [vmem:[%s1420] sm:$0xff] %vm752, %v1419
    // Predicated region
    $region58: #{qnetwork_forward.1} parent=1 // pred_check
      _
    $region59: #{qnetwork_forward.1} parent=1 // pred_check_branch
      %1423 = sbr.rel (0) target = $region61
    $region60: #{qnetwork_forward.1} parent=1 // pred_region
      _
    $region61: #{qnetwork_forward.1} parent=1 // pred_fallthru
      _
    // Predicated region
    $region62: #{qnetwork_forward.1} parent=1 // pred_check
      _
    $region63: #{qnetwork_forward.1} parent=1 // pred_check_branch
      %1425 = sbr.rel (0) target = $region65
    $region64: #{qnetwork_forward.1} parent=1 // pred_region
      _
    $region65: #{qnetwork_forward.1} parent=1 // pred_fallthru
      _
    %1426 = vsyncpa [#allocation3], 1
    %1427 = vsyncpa [#allocation6], 1
    %1428 = vsyncpa [#allocation4], 1

</llo_original>
